<compile_context>
chip_gen: v7x
topology: tpu7x:2x2x1
jax: 0.10.0
libtpu: 0.0.40
codegen_flags: <defaults>
</compile_context>

<pallas_src>
import functools
import numpy as np
import jax
import jax.numpy as jnp
from jax.experimental import pallas as pl
from jax.experimental.pallas import tpu as pltpu

BN_EPS = 1e-5
N_LAYERS = 4
ENC_STRIDES = [2, 2, 8, 8]
DEC_STRIDES = [8, 8, 2, 2]
MAX_TL = 512       # row-tile size (length axis)
MAX_TN = 512       # output-channel tile size


def _ru(x, m):
    return ((x + m - 1) // m) * m


def _cpad(c):
    return max(128, _ru(c, 128))


@functools.lru_cache(maxsize=None)
def _vmem_limit_bytes():
    # Generation-aware VMEM budget (v7x only has 64 MiB per TensorCore).
    try:
        cap = int(getattr(pltpu.get_tpu_info(), "vmem_capacity_bytes", 64 * 1024 * 1024))
    except Exception:
        cap = 64 * 1024 * 1024
    return int(min((cap * 3) // 4, 96 * 1024 * 1024))


# ---------------------------------------------------------------------------
# Generic fused conv kernel:
#   y   = ELU( (sum_k X[t + k*dil] @ W[k]) * scale + shift )
#   out = gamma * (y + sum(pre)) + beta + sum(post)
# X is the (possibly multi-addend, summed in VMEM) channels-last input window.
# ---------------------------------------------------------------------------
@functools.lru_cache(maxsize=None)
def _get_conv_call(key):
    (B, n_i, n_j, TL, TIN, K, dil, cin_p, cout_p, TN,
     n_in, n_pre, n_post, rows_in, rows_out) = key

    def kernel(*refs):
        xs = refs[0:n_in]                      # raw HBM refs (pl.ANY)
        w_ref = refs[n_in]                     # (K, cin_p, TN)
        s_ref = refs[n_in + 1]                 # (1, TN)
        t_ref = refs[n_in + 2]                 # (1, TN)
        fb_ref = refs[n_in + 3]                # (2,) SMEM: gamma, beta
        pre = refs[n_in + 4:n_in + 4 + n_pre]
        post = refs[n_in + 4 + n_pre:n_in + 4 + n_pre + n_post]
        o_ref = refs[n_in + 4 + n_pre + n_post]
        scratch = refs[n_in + 5 + n_pre + n_post:]
        xw = scratch[0]                        # (TIN, cin_p) input window

        b = pl.program_id(0)
        i = pl.program_id(1)
        j = pl.program_id(2)

        # Fetch (and sum) the input row window once per (b, i); reuse across j tiles.
        @pl.when(j == 0)
        def _():
            start = pl.multiple_of(i * TL, 8)
            pltpu.sync_copy(xs[0].at[b, pl.ds(start, TIN), :], xw)
            if n_in > 1:
                xt = scratch[1]
                for m in range(1, n_in):
                    pltpu.sync_copy(xs[m].at[b, pl.ds(start, TIN), :], xt)
                    xw[...] = xw[...] + xt[...]

        acc = jnp.zeros((TL, TN), jnp.float32)
        for k in range(K):                     # K tap matmuls on the MXU
            acc = acc + jnp.dot(xw[pl.ds(k * dil, TL), :], w_ref[k],
                                preferred_element_type=jnp.float32)

        y = acc * s_ref[...] + t_ref[...]      # conv bias + folded BN
        y = jnp.where(y > 0.0, y, jnp.exp(jnp.minimum(y, 0.0)) - 1.0)  # ELU(alpha=1)
        for p in pre:                          # residual adds before FiLM
            y = y + p[...]
        y = y * fb_ref[0] + fb_ref[1]          # fused FiLM (1, 0 when unused)
        for p in post:                         # skip adds after FiLM
            y = y + p[...]
        o_ref[...] = y

    in_specs = [pl.BlockSpec(memory_space=pl.ANY) for _ in range(n_in)]
    in_specs.append(pl.BlockSpec((K, cin_p, TN), lambda b, i, j: (0, 0, j)))
    in_specs.append(pl.BlockSpec((1, TN), lambda b, i, j: (0, j)))
    in_specs.append(pl.BlockSpec((1, TN), lambda b, i, j: (0, j)))
    in_specs.append(pl.BlockSpec(memory_space=pltpu.MemorySpace.SMEM))
    for _ in range(n_pre + n_post):
        in_specs.append(pl.BlockSpec((None, TL, TN), lambda b, i, j: (b, i, j)))

    scratch_shapes = [pltpu.VMEM((TIN, cin_p), jnp.float32)]
    if n_in > 1:
        scratch_shapes.append(pltpu.VMEM((TIN, cin_p), jnp.float32))

    return pl.pallas_call(
        kernel,
        out_shape=jax.ShapeDtypeStruct((B, rows_out, cout_p), jnp.float32),
        grid=(B, n_i, n_j),
        in_specs=in_specs,
        out_specs=pl.BlockSpec((None, TL, TN), lambda b, i, j: (b, i, j)),
        scratch_shapes=scratch_shapes,
        compiler_params=pltpu.CompilerParams(
            dimension_semantics=("parallel", "parallel", "arbitrary"),
            vmem_limit_bytes=_vmem_limit_bytes(),
        ),
    )


def fused_conv(xs, L_true, wp, *, K, dil=1, pad_l=0, pad_r=0,
               gamma=None, beta=None, pre=(), post=()):
    """xs: list of channels-last (B, rows, cin_p) arrays summed as the conv input.
       pre/post: lists of (array, true_len) added in the epilogue before/after FiLM.
       Returns (out (B, rows_out, cout_p), L_out); rows beyond L_out are don't-care."""
    w = wp["w"]
    Kw, cin_p, cout_p = w.shape
    assert Kw == K and xs[0].shape[-1] == cin_p
    B = xs[0].shape[0]

    L_out = L_true + pad_l + pad_r - (K - 1) * dil
    assert L_out >= 1
    TL = min(MAX_TL, _ru(L_out, 8))
    n_i = -(-L_out // TL)
    rows_out = n_i * TL
    halo_pad = _ru((K - 1) * dil, 8) if K > 1 else 0
    TIN = TL + halo_pad
    rows_in = rows_out + halo_pad
    TN = min(MAX_TN, cout_p)
    assert cout_p % TN == 0
    n_j = cout_p // TN

    prepped = []
    for a in xs:
        assert a.shape[1] >= L_true and a.shape[-1] == cin_p
        if pad_l == 0 and pad_r == 0 and a.shape[1] >= rows_in:
            prepped.append(a)          # valid conv: tail garbage only feeds cropped rows
        else:
            a = a[:, :L_true, :]
            prepped.append(jnp.pad(a, ((0, 0), (pad_l, rows_in - pad_l - L_true), (0, 0))))

    def _fit(a):
        assert a.shape[-1] == cout_p
        r = a.shape[1]
        if r < rows_out:
            return jnp.pad(a, ((0, 0), (0, rows_out - r), (0, 0)))
        if r > rows_out:
            return a[:, :rows_out, :]
        return a

    pre_a, post_a = [], []
    for a, la in pre:
        assert la >= L_out
        pre_a.append(_fit(a))
    for a, la in post:
        assert la >= L_out
        post_a.append(_fit(a))

    if gamma is None:
        fb = jnp.array([1.0, 0.0], jnp.float32)
    else:
        fb = jnp.stack([gamma, beta]).astype(jnp.float32)

    call = _get_conv_call((B, n_i, n_j, TL, TIN, K, dil, cin_p, cout_p, TN,
                           len(prepped), len(pre_a), len(post_a), rows_in, rows_out))
    out = call(*prepped, w, wp["scale"], wp["shift"], fb, *pre_a, *post_a)
    return out, L_out


# ---------------------------------------------------------------------------
# One-time parameter packing (weight layout, BN folding, channel padding)
# ---------------------------------------------------------------------------
def _fold_bn(p):
    # TODO(synk): eval-mode BN with fresh running stats (mean=0, var=1), as before.
    scale = p["bn_w"] / np.sqrt(1.0 + BN_EPS)
    shift = p["b"] * scale + p["bn_b"]
    return scale, shift


def _pack_conv(p, *, cin, cout, K):
    cin_p, cout_p = _cpad(cin), _cpad(cout)
    w = jnp.zeros((K, cin_p, cout_p), jnp.float32)
    w = w.at[:, :cin, :cout].set(jnp.transpose(p["w"], (2, 1, 0)))
    scale, shift = _fold_bn(p)
    sc = jnp.zeros((1, cout_p), jnp.float32).at[0, :cout].set(scale)
    sh = jnp.zeros((1, cout_p), jnp.float32).at[0, :cout].set(shift)
    return {"w": w, "scale": sc, "shift": sh}


def _pack_convT_polyphase(p, *, cin, cout, stride):
    # ConvTranspose1d(cin, cout, k=2s, stride=s) == stride-1 K=2 conv on x padded (1,1):
    #   out[q, r*cout + c] = x'[q] @ w[:,:,s+r] + x'[q+1] @ w[:,:,r]   (polyphase)
    cin_p, cout_p = _cpad(cin), _cpad(cout)
    w = jnp.zeros((2, cin_p, stride * cout_p), jnp.float32)
    scale, shift = _fold_bn(p)
    sc = jnp.zeros((1, stride * cout_p), jnp.float32)
    sh = jnp.zeros((1, stride * cout_p), jnp.float32)
    for r in range(stride):
        lo = r * cout_p
        w = w.at[0, :cin, lo:lo + cout].set(p["w"][:, :, stride + r])
        w = w.at[1, :cin, lo:lo + cout].set(p["w"][:, :, r])
        sc = sc.at[0, lo:lo + cout].set(scale)
        sh = sh.at[0, lo:lo + cout].set(shift)
    return {"w": w, "scale": sc, "shift": sh, "phase_cout_p": cout_p, "stride": stride}


def _pack_strided_conv_folded(p, *, cin, cout, stride):
    # Conv1d(cin, cout, k=2s, stride=s, valid) with stride folded into channels:
    #   X[q] = concat_r x[q*s + r];  out[q] = X[q] @ W0 + X[q+1] @ W1
    cin_p, cout_p = _cpad(cin), _cpad(cout)
    w = jnp.zeros((2, stride * cin_p, cout_p), jnp.float32)
    for m in range(2):
        for r in range(stride):
            lo = r * cin_p
            w = w.at[m, lo:lo + cin, :cout].set(p["w"][:, :, m * stride + r].T)
    scale, shift = _fold_bn(p)
    sc = jnp.zeros((1, cout_p), jnp.float32).at[0, :cout].set(scale)
    sh = jnp.zeros((1, cout_p), jnp.float32).at[0, :cout].set(shift)
    return {"w": w, "scale": sc, "shift": sh, "phase_cin_p": cin_p, "stride": stride}


def pack_params(p):
    enc_in, enc_out = [32, 64, 128, 256], [64, 128, 256, 512]
    dec_in, dec_out = [512, 256, 128, 64], [256, 128, 64, 32]
    pp = {
        "encConv1": _pack_conv(p["encConv1"], cin=1, cout=32, K=7),
        "encConv2": _pack_conv(p["encConv2"], cin=512, cout=256, K=7),
        "midConv": _pack_conv(p["midConv"], cin=256, cout=512, K=7),
        "decConv1": _pack_conv(p["decConv1"], cin=32, cout=1, K=7),
        "film_wT": jnp.transpose(p["film_w"]),
        "film_b": p["film_b"],
        "encoder": [],
        "decoder": [],
    }
    for i, (ci, co, s) in enumerate(zip(enc_in, enc_out, ENC_STRIDES)):
        e = p["encoder"][i]
        pp["encoder"].append({
            "main": _pack_convT_polyphase(e["main"], cin=ci, cout=co, stride=s),
            "res11": _pack_conv(e["res11"], cin=co, cout=co, K=3),
            "res12": _pack_conv(e["res12"], cin=co, cout=co, K=1),
            "res21": _pack_conv(e["res21"], cin=co, cout=co, K=3),
            "res22": _pack_conv(e["res22"], cin=co, cout=co, K=1),
            "res31": _pack_conv(e["res31"], cin=co, cout=co, K=3),
            "res32": _pack_conv(e["res32"], cin=co, cout=co, K=1),
        })
    for i, (ci, co, s) in enumerate(zip(dec_in, dec_out, DEC_STRIDES)):
        d = p["decoder"][i]
        c2 = co // 2
        pp["decoder"].append({
            "res11": _pack_conv(d["res11"], cin=ci, cout=c2, K=3),
            "res12": _pack_conv(d["res12"], cin=c2, cout=c2, K=1),
            "res21": _pack_conv(d["res21"], cin=c2, cout=c2, K=3),
            "res22": _pack_conv(d["res22"], cin=c2, cout=c2, K=1),
            "res31": _pack_conv(d["res31"], cin=c2, cout=c2, K=3),
            "res32": _pack_conv(d["res32"], cin=c2, cout=c2, K=1),
            "up": _pack_strided_conv_folded(d["up"], cin=c2, cout=co, stride=s),
        })
    return pp


# ---------------------------------------------------------------------------
# Blocks
# ---------------------------------------------------------------------------
def down_block(o, L, pp, gamma, beta, stride):
    # TODO(synk): as before, residual convs use 'same' padding (= dilation) so the
    # source's shape-invalid residual adds become well defined.
    o1, L1 = fused_conv([o], L, pp["main"], K=2, dil=1, pad_l=1, pad_r=1,
                        gamma=gamma, beta=beta)                     # polyphase ConvT + FiLM
    B, R, _ = o1.shape
    o1 = o1.reshape(B, R * stride, pp["main"]["phase_cout_p"])      # free channels-last reshape
    L1 = L1 * stride
    o2, L2 = fused_conv([o1], L1, pp["res11"], K=3, dil=1, pad_l=1, pad_r=1)
    o3, L3 = fused_conv([o2], L2, pp["res12"], K=1)
    o4, L4 = fused_conv([o3, o1], L3, pp["res21"], K=3, dil=3, pad_l=3, pad_r=3)
    o5, L5 = fused_conv([o4], L4, pp["res22"], K=1)
    o6, L6 = fused_conv([o1, o3, o5], L5, pp["res31"], K=3, dil=9, pad_l=9, pad_r=9)
    o8, L8 = fused_conv([o6], L6, pp["res32"], K=1, gamma=gamma, beta=beta,
                        pre=[(o1, L1), (o3, L3), (o5, L5)])         # o1+o3+o5+o7 then FiLM
    return o8, L8


def up_block(o, L, pp, gamma, beta, stride, skip, skip_L):
    # TODO(synk): as before, the shape-invalid o1 additions use the residual11
    # projection (o2) in its place.
    o2, L2 = fused_conv([o], L, pp["res11"], K=3, dil=1, pad_l=1, pad_r=1)
    o3, L3 = fused_conv([o2], L2, pp["res12"], K=1)
    o4, L4 = fused_conv([o3, o2], L3, pp["res21"], K=3, dil=3, pad_l=3, pad_r=3)
    o5, L5 = fused_conv([o4], L4, pp["res22"], K=1)
    o6, L6 = fused_conv([o2, o3, o5], L5, pp["res31"], K=3, dil=9, pad_l=9, pad_r=9)
    o7, L7 = fused_conv([o6], L6, pp["res32"], K=1)

    n = L7 // stride
    cp = pp["up"]["phase_cin_p"]

    def _fold(a):                                                    # stride -> channels
        return a[:, :n * stride, :].reshape(a.shape[0], n, stride * cp)

    return fused_conv([_fold(o2), _fold(o3), _fold(o5), _fold(o7)], n, pp["up"],
                      K=2, gamma=gamma, beta=beta, post=[(skip, skip_L)])


# ---------------------------------------------------------------------------
# Model
# ---------------------------------------------------------------------------
def model_forward(pp, x, cond1, cond2):
    B, Cx, L0 = x.shape
    xcl = jnp.pad(jnp.transpose(x, (0, 2, 1)), ((0, 0), (0, 0), (0, 128 - Cx)))
    tmp = [(xcl, L0)]

    o, L = fused_conv([xcl], L0, pp["encConv1"], K=7)               # Conv1d(1, 32, k=7)
    tmp.append((o, L))

    # TODO(synk): as before, the film_gen Sequential (which cannot call the 3-arg
    # DownSamplingLayer.forward) is reduced to its Flatten + Linear(1024, 10) head and the
    # gamma/beta split is taken over the feature dim; computed in plain XLA (tiny matmul).
    f1 = cond1.reshape(cond1.shape[0], -1) @ pp["film_wT"] + pp["film_b"]
    f2 = cond2.reshape(cond2.shape[0], -1) @ pp["film_wT"] + pp["film_b"]
    film = ((f1 + f2) * 0.5).reshape(-1)
    gammas, betas = film[:N_LAYERS + 1], film[N_LAYERS + 1:]

    for i in range(N_LAYERS):
        o, L = down_block(o, L, pp["encoder"][i], gammas[i], betas[i], ENC_STRIDES[i])
        tmp.append((o, L))

    o, L = fused_conv([o], L, pp["encConv2"], K=7,
                      gamma=gammas[N_LAYERS], beta=betas[N_LAYERS])  # Conv(512,256) + FiLM
    # TODO(synk): the source's decConv1(256->512) is overwritten in __init__; the intended
    # 256->512 mid conv is kept as a separate parameter set (as before).
    o, L = fused_conv([o], L, pp["midConv"], K=7, post=[tmp[-1]])    # Conv(256,512) + skip

    for i in range(N_LAYERS):
        # TODO(synk): source indexes gammas[n_layers+i+1] (out of range); wrap modulo
        # (n_layers + 1) as in the previous version.
        idx = (N_LAYERS + i + 1) % (N_LAYERS + 1)
        skip, skip_L = tmp[N_LAYERS - i]
        o, L = up_block(o, L, pp["decoder"][i], gammas[idx], betas[idx],
                        DEC_STRIDES[i], skip, skip_L)

    o, L = fused_conv([o], L, pp["decConv1"], K=7, post=[tmp[0]])    # Conv1d(32, 1, k=7) + x
    return jnp.transpose(o[:, :L, :1], (0, 2, 1))


# ---------------------------------------------------------------------------
# Deterministic parameter initialization (raw PyTorch-layout params)
# ---------------------------------------------------------------------------
def _init_conv(key, c_out, c_in, k):
    kw, kb, kg, kbb = jax.random.split(key, 4)
    return {
        "w": jax.random.normal(kw, (c_out, c_in, k), jnp.float32) / np.sqrt(c_in * k),
        "b": 0.01 * jax.random.normal(kb, (c_out,), jnp.float32),
        "bn_w": 1.0 + 0.05 * jax.random.normal(kg, (c_out,), jnp.float32),
        "bn_b": 0.01 * jax.random.normal(kbb, (c_out,), jnp.float32),
    }


def _init_convT(key, c_in, c_out, k):
    kw, kb, kg, kbb = jax.random.split(key, 4)
    return {
        "w": jax.random.normal(kw, (c_in, c_out, k), jnp.float32) / np.sqrt(c_in * k),
        "b": 0.01 * jax.random.normal(kb, (c_out,), jnp.float32),
        "bn_w": 1.0 + 0.05 * jax.random.normal(kg, (c_out,), jnp.float32),
        "bn_b": 0.01 * jax.random.normal(kbb, (c_out,), jnp.float32),
    }


def init_params(key):
    keys = iter(jax.random.split(key, 128))
    nk = lambda: next(keys)
    enc_in, enc_out = [32, 64, 128, 256], [64, 128, 256, 512]
    dec_in, dec_out = [512, 256, 128, 64], [256, 128, 64, 32]

    params = {"encConv1": _init_conv(nk(), 32, 1, 7), "encoder": [], "decoder": []}
    for ci, co, s in zip(enc_in, enc_out, ENC_STRIDES):
        # TODO(synk): source declares the residual convs with channel_in inputs, which is
        # shape-inconsistent with the channel_out tensors they act on; we use channel_out.
        params["encoder"].append({
            "main": _init_convT(nk(), ci, co, 2 * s),
            "res11": _init_conv(nk(), co, co, 3),
            "res12": _init_conv(nk(), co, co, 1),
            "res21": _init_conv(nk(), co, co, 3),
            "res22": _init_conv(nk(), co, co, 1),
            "res31": _init_conv(nk(), co, co, 3),
            "res32": _init_conv(nk(), co, co, 1),
        })
    params["encConv2"] = _init_conv(nk(), 256, 512, 7)
    params["film_w"] = jax.random.normal(nk(), (2 * (N_LAYERS + 1), 1024), jnp.float32) / np.sqrt(1024)
    params["film_b"] = 0.01 * jax.random.normal(nk(), (2 * (N_LAYERS + 1),), jnp.float32)
    params["midConv"] = _init_conv(nk(), 512, 256, 7)
    for ci, co, s in zip(dec_in, dec_out, DEC_STRIDES):
        c2 = co // 2
        params["decoder"].append({
            "res11": _init_conv(nk(), c2, ci, 3),
            "res12": _init_conv(nk(), c2, c2, 1),
            "res21": _init_conv(nk(), c2, c2, 3),
            "res22": _init_conv(nk(), c2, c2, 1),
            "res31": _init_conv(nk(), c2, c2, 3),
            "res32": _init_conv(nk(), c2, c2, 1),
            "up": _init_conv(nk(), co, c2, 2 * s),
        })
    params["decConv1"] = _init_conv(nk(), 1, 32, 7)
    return params


# ---------------------------------------------------------------------------
if __name__ == "__main__":
    root = jax.random.PRNGKey(0)
    kp, kx, k1, k2 = jax.random.split(root, 4)
    raw = init_params(kp)
    params = pack_params(raw)                                   # hoisted weight prep

    x = jax.random.normal(kx, (2, 1, 16), jnp.float32)          # (B, C=1, L)
    cond1 = jax.random.normal(k1, (1, 1024), jnp.float32)       # film head input
    cond2 = jax.random.normal(k2, (1, 1024), jnp.float32)

    out = model_forward(params, x, cond1, cond2)
    out = jax.block_until_ready(out)
    assert out.ndim == 3 and out.shape[0] == 2 and out.shape[1] == 1
    assert bool(jnp.all(jnp.isfinite(out)))
    print("KERNEL_OK")
</pallas_src>

<mosaic_0001>
module attributes {stable_mosaic.version = 11 : i64} {
  func.func @kernel(%arg0: i32, %arg1: i32, %arg2: i32, %arg3: memref<2x24x128xf32, #tpu.memory_space<any>>, %arg4: memref<7x128x128xf32, #tpu.memory_space<vmem>>, %arg5: memref<1x128xf32, #tpu.memory_space<vmem>>, %arg6: memref<1x128xf32, #tpu.memory_space<vmem>>, %arg7: memref<2xf32, #tpu.memory_space<smem>>, %arg8: memref<1x16x128xf32, #tpu.memory_space<vmem>>, %arg9: memref<24x128xf32, #tpu.memory_space<vmem>>) attributes {dimension_semantics = [#tpu.dimension_semantics<parallel>, #tpu.dimension_semantics<parallel>, #tpu.dimension_semantics<arbitrary>], iteration_bounds = array<i64: 2, 1, 1>, scalar_prefetch = 0 : i64, scratch_operands = 1 : i64, tpu.core_type = #tpu.core_type<tc>, window_params = [{}, {transform_indices = @transform_1, window_bounds = array<i64: 7, 128, 128>}, {transform_indices = @transform_2, window_bounds = array<i64: 1, 128>}, {transform_indices = @transform_3, window_bounds = array<i64: 1, 128>}, {transform_indices = @transform_4, window_bounds = array<i64: 2>}, {transform_indices = @transform_5, window_bounds = array<i64: 1, 16, 128>}]} {
    %c0_i32 = arith.constant 0 : i32
    %0 = arith.cmpi eq, %arg2, %c0_i32 : i32
    %1 = arith.extui %0 : i1 to i32
    %c0_i32_0 = arith.constant 0 : i32
    %2 = arith.cmpi ne, %1, %c0_i32_0 : i32
    scf.if %2 {
      %c16_i32 = arith.constant 16 : i32
      %62 = arith.muli %arg1, %c16_i32 : i32
      %63 = tpu.assume_multiple %62, 8 : i32
      "tpu.region"() ({
        %64 = tpu.sem_alloc : memref<!tpu.dma_semaphore, #tpu.memory_space<semaphore_mem>>
        %c0_i32_48 = arith.constant 0 : i32
        %65 = tpu.memref_slice %arg3[%arg0, %63, %c0_i32_48] : memref<2x24x128xf32, #tpu.memory_space<any>> -> memref<1x24x128xf32, #tpu.memory_space<any>>
        %66 = tpu.memref_squeeze %65 : memref<1x24x128xf32, #tpu.memory_space<any>> -> memref<24x128xf32, #tpu.memory_space<any>>
        tpu.enqueue_dma source(%66 : memref<24x128xf32, #tpu.memory_space<any>>) target(%arg9 : memref<24x128xf32, #tpu.memory_space<vmem>>) target_semaphore(%64 : memref<!tpu.dma_semaphore, #tpu.memory_space<semaphore_mem>>)
        %c0_i32_49 = arith.constant 0 : i32
        %67 = tpu.memref_slice %arg3[%arg0, %63, %c0_i32_49] : memref<2x24x128xf32, #tpu.memory_space<any>> -> memref<1x24x128xf32, #tpu.memory_space<any>>
        %68 = tpu.memref_squeeze %67 : memref<1x24x128xf32, #tpu.memory_space<any>> -> memref<24x128xf32, #tpu.memory_space<any>>
        tpu.wait_dma2 semaphore(%64 : memref<!tpu.dma_semaphore, #tpu.memory_space<semaphore_mem>>) src(%68 : memref<24x128xf32, #tpu.memory_space<any>>) dst(%arg9 : memref<24x128xf32, #tpu.memory_space<vmem>>)
        tpu.yield
      }) : () -> ()
    } else {
    }
    %cst = arith.constant 0.000000e+00 : f32
    %3 = vector.broadcast %cst : f32 to vector<16x128xf32>
    %c0 = arith.constant 0 : index
    %c0_1 = arith.constant 0 : index
    %4 = vector.load %arg9[%c0, %c0_1] : memref<24x128xf32, #tpu.memory_space<vmem>>, vector<16x128xf32>
    %c0_2 = arith.constant 0 : index
    %c0_3 = arith.constant 0 : index
    %c0_4 = arith.constant 0 : index
    %5 = vector.load %arg4[%c0_2, %c0_3, %c0_4] : memref<7x128x128xf32, #tpu.memory_space<vmem>>, vector<1x128x128xf32>
    %6 = vector.shape_cast %5 : vector<1x128x128xf32> to vector<128x128xf32>
    %cst_5 = arith.constant dense<0.000000e+00> : vector<16x128xf32>
    %7 = tpu.matmul %4, %6, %cst_5 {dimension_numbers = #tpu.dot_dimension_numbers<[1], [0], [0], [1], [0, 0, 1, 1], [], []>} : vector<16x128xf32>, vector<128x128xf32>, vector<16x128xf32> -> vector<16x128xf32>
    %8 = arith.addf %3, %7 : vector<16x128xf32>
    %c1 = arith.constant 1 : index
    %c0_6 = arith.constant 0 : index
    %9 = vector.load %arg9[%c1, %c0_6] : memref<24x128xf32, #tpu.memory_space<vmem>>, vector<16x128xf32>
    %c1_7 = arith.constant 1 : index
    %c0_8 = arith.constant 0 : index
    %c0_9 = arith.constant 0 : index
    %10 = vector.load %arg4[%c1_7, %c0_8, %c0_9] : memref<7x128x128xf32, #tpu.memory_space<vmem>>, vector<1x128x128xf32>
    %11 = vector.shape_cast %10 : vector<1x128x128xf32> to vector<128x128xf32>
    %cst_10 = arith.constant dense<0.000000e+00> : vector<16x128xf32>
    %12 = tpu.matmul %9, %11, %cst_10 {dimension_numbers = #tpu.dot_dimension_numbers<[1], [0], [0], [1], [0, 0, 1, 1], [], []>} : vector<16x128xf32>, vector<128x128xf32>, vector<16x128xf32> -> vector<16x128xf32>
    %13 = arith.addf %8, %12 : vector<16x128xf32>
    %c2 = arith.constant 2 : index
    %c0_11 = arith.constant 0 : index
    %14 = vector.load %arg9[%c2, %c0_11] : memref<24x128xf32, #tpu.memory_space<vmem>>, vector<16x128xf32>
    %c2_12 = arith.constant 2 : index
    %c0_13 = arith.constant 0 : index
    %c0_14 = arith.constant 0 : index
    %15 = vector.load %arg4[%c2_12, %c0_13, %c0_14] : memref<7x128x128xf32, #tpu.memory_space<vmem>>, vector<1x128x128xf32>
    %16 = vector.shape_cast %15 : vector<1x128x128xf32> to vector<128x128xf32>
    %cst_15 = arith.constant dense<0.000000e+00> : vector<16x128xf32>
    %17 = tpu.matmul %14, %16, %cst_15 {dimension_numbers = #tpu.dot_dimension_numbers<[1], [0], [0], [1], [0, 0, 1, 1], [], []>} : vector<16x128xf32>, vector<128x128xf32>, vector<16x128xf32> -> vector<16x128xf32>
    %18 = arith.addf %13, %17 : vector<16x128xf32>
    %c3 = arith.constant 3 : index
    %c0_16 = arith.constant 0 : index
    %19 = vector.load %arg9[%c3, %c0_16] : memref<24x128xf32, #tpu.memory_space<vmem>>, vector<16x128xf32>
    %c3_17 = arith.constant 3 : index
    %c0_18 = arith.constant 0 : index
    %c0_19 = arith.constant 0 : index
    %20 = vector.load %arg4[%c3_17, %c0_18, %c0_19] : memref<7x128x128xf32, #tpu.memory_space<vmem>>, vector<1x128x128xf32>
    %21 = vector.shape_cast %20 : vector<1x128x128xf32> to vector<128x128xf32>
    %cst_20 = arith.constant dense<0.000000e+00> : vector<16x128xf32>
    %22 = tpu.matmul %19, %21, %cst_20 {dimension_numbers = #tpu.dot_dimension_numbers<[1], [0], [0], [1], [0, 0, 1, 1], [], []>} : vector<16x128xf32>, vector<128x128xf32>, vector<16x128xf32> -> vector<16x128xf32>
    %23 = arith.addf %18, %22 : vector<16x128xf32>
    %c4 = arith.constant 4 : index
    %c0_21 = arith.constant 0 : index
    %24 = vector.load %arg9[%c4, %c0_21] : memref<24x128xf32, #tpu.memory_space<vmem>>, vector<16x128xf32>
    %c4_22 = arith.constant 4 : index
    %c0_23 = arith.constant 0 : index
    %c0_24 = arith.constant 0 : index
    %25 = vector.load %arg4[%c4_22, %c0_23, %c0_24] : memref<7x128x128xf32, #tpu.memory_space<vmem>>, vector<1x128x128xf32>
    %26 = vector.shape_cast %25 : vector<1x128x128xf32> to vector<128x128xf32>
    %cst_25 = arith.constant dense<0.000000e+00> : vector<16x128xf32>
    %27 = tpu.matmul %24, %26, %cst_25 {dimension_numbers = #tpu.dot_dimension_numbers<[1], [0], [0], [1], [0, 0, 1, 1], [], []>} : vector<16x128xf32>, vector<128x128xf32>, vector<16x128xf32> -> vector<16x128xf32>
    %28 = arith.addf %23, %27 : vector<16x128xf32>
    %c5 = arith.constant 5 : index
    %c0_26 = arith.constant 0 : index
    %29 = vector.load %arg9[%c5, %c0_26] : memref<24x128xf32, #tpu.memory_space<vmem>>, vector<16x128xf32>
    %c5_27 = arith.constant 5 : index
    %c0_28 = arith.constant 0 : index
    %c0_29 = arith.constant 0 : index
    %30 = vector.load %arg4[%c5_27, %c0_28, %c0_29] : memref<7x128x128xf32, #tpu.memory_space<vmem>>, vector<1x128x128xf32>
    %31 = vector.shape_cast %30 : vector<1x128x128xf32> to vector<128x128xf32>
    %cst_30 = arith.constant dense<0.000000e+00> : vector<16x128xf32>
    %32 = tpu.matmul %29, %31, %cst_30 {dimension_numbers = #tpu.dot_dimension_numbers<[1], [0], [0], [1], [0, 0, 1, 1], [], []>} : vector<16x128xf32>, vector<128x128xf32>, vector<16x128xf32> -> vector<16x128xf32>
    %33 = arith.addf %28, %32 : vector<16x128xf32>
    %c6 = arith.constant 6 : index
    %c0_31 = arith.constant 0 : index
    %34 = vector.load %arg9[%c6, %c0_31] : memref<24x128xf32, #tpu.memory_space<vmem>>, vector<16x128xf32>
    %c6_32 = arith.constant 6 : index
    %c0_33 = arith.constant 0 : index
    %c0_34 = arith.constant 0 : index
    %35 = vector.load %arg4[%c6_32, %c0_33, %c0_34] : memref<7x128x128xf32, #tpu.memory_space<vmem>>, vector<1x128x128xf32>
    %36 = vector.shape_cast %35 : vector<1x128x128xf32> to vector<128x128xf32>
    %cst_35 = arith.constant dense<0.000000e+00> : vector<16x128xf32>
    %37 = tpu.matmul %34, %36, %cst_35 {dimension_numbers = #tpu.dot_dimension_numbers<[1], [0], [0], [1], [0, 0, 1, 1], [], []>} : vector<16x128xf32>, vector<128x128xf32>, vector<16x128xf32> -> vector<16x128xf32>
    %38 = arith.addf %33, %37 : vector<16x128xf32>
    %c0_36 = arith.constant 0 : index
    %c0_37 = arith.constant 0 : index
    %39 = vector.load %arg5[%c0_36, %c0_37] : memref<1x128xf32, #tpu.memory_space<vmem>>, vector<1x128xf32>
    %40 = vector.broadcast %39 : vector<1x128xf32> to vector<16x128xf32>
    %41 = arith.mulf %38, %40 : vector<16x128xf32>
    %c0_38 = arith.constant 0 : index
    %c0_39 = arith.constant 0 : index
    %42 = vector.load %arg6[%c0_38, %c0_39] : memref<1x128xf32, #tpu.memory_space<vmem>>, vector<1x128xf32>
    %43 = vector.broadcast %42 : vector<1x128xf32> to vector<16x128xf32>
    %44 = arith.addf %41, %43 : vector<16x128xf32>
    %cst_40 = arith.constant 0.000000e+00 : f32
    %45 = vector.broadcast %cst_40 : f32 to vector<16x128xf32>
    %46 = arith.cmpf ogt, %44, %45 : vector<16x128xf32>
    %cst_41 = arith.constant 0.000000e+00 : f32
    %47 = vector.broadcast %cst_41 : f32 to vector<16x128xf32>
    %48 = arith.minimumf %44, %47 : vector<16x128xf32>
    %49 = math.exp %48 : vector<16x128xf32>
    %cst_42 = arith.constant 1.000000e+00 : f32
    %50 = vector.broadcast %cst_42 : f32 to vector<16x128xf32>
    %51 = arith.subf %49, %50 : vector<16x128xf32>
    %52 = arith.select %46, %44, %51 : vector<16x128xi1>, vector<16x128xf32>
    %c0_43 = arith.constant 0 : index
    %53 = memref.load %arg7[%c0_43] : memref<2xf32, #tpu.memory_space<smem>>
    %54 = vector.broadcast %53 : f32 to vector<16x128xf32>
    %55 = arith.mulf %52, %54 : vector<16x128xf32>
    %c1_44 = arith.constant 1 : index
    %56 = memref.load %arg7[%c1_44] : memref<2xf32, #tpu.memory_space<smem>>
    %57 = vector.broadcast %56 : f32 to vector<16x128xf32>
    %58 = arith.addf %55, %57 : vector<16x128xf32>
    %c0_45 = arith.constant 0 : index
    %c0_46 = arith.constant 0 : index
    %c0_47 = arith.constant 0 : index
    %59 = vector.load %arg8[%c0_45, %c0_46, %c0_47] : memref<1x16x128xf32, #tpu.memory_space<vmem>>, vector<1x16x128xf32>
    %60 = vector.shape_cast %59 : vector<1x16x128xf32> to vector<16x128xf32>
    %61 = vector.shape_cast %58 : vector<16x128xf32> to vector<1x16x128xf32>
    tpu.vector_store %arg8[%c0_45, %c0_46, %c0_47], %61 {strides = array<i32>} : memref<1x16x128xf32, #tpu.memory_space<vmem>>, vector<1x16x128xf32>,
    return
  }
  func.func @transform_1(%arg0: i32, %arg1: i32, %arg2: i32) -> (i32, i32, i32) {
    %c0_i32 = arith.constant 0 : i32
    %c0_i32_0 = arith.constant 0 : i32
    %c0_i32_1 = arith.constant 0 : i32
    return %c0_i32, %c0_i32_0, %arg2 : i32, i32, i32
  }
  func.func @transform_2(%arg0: i32, %arg1: i32, %arg2: i32) -> (i32, i32) {
    %c0_i32 = arith.constant 0 : i32
    %c0_i32_0 = arith.constant 0 : i32
    return %c0_i32, %arg2 : i32, i32
  }
  func.func @transform_3(%arg0: i32, %arg1: i32, %arg2: i32) -> (i32, i32) {
    %c0_i32 = arith.constant 0 : i32
    %c0_i32_0 = arith.constant 0 : i32
    return %c0_i32, %arg2 : i32, i32
  }
  func.func @transform_4(%arg0: i32, %arg1: i32, %arg2: i32) -> i32 {
    %c0_i32 = arith.constant 0 : i32
    %c0_i32_0 = arith.constant 0 : i32
    return %c0_i32 : i32
  }
  func.func @transform_5(%arg0: i32, %arg1: i32, %arg2: i32) -> (i32, i32, i32) {
    %c0_i32 = arith.constant 0 : i32
    return %arg0, %arg1, %arg2 : i32, i32, i32
  }
}

</mosaic_0001>

<llo_original>
// kernel: tpu_custom_call.1
$region0: #{tpu_custom_call.1}
  #allocation0 [shape = 'u32[]', space=smem, size = 0x4, offset = 0x4, fixed_abs, tag = 'smem constant byte address 0x4 - core index']
  #allocation1 [shape = 'u32[144,128]{1,0:T(1,128)}', space=vmem, size = 0x12000, scoped, tag = 'internal scratch']
  #allocation2 [shape = 'f32[24,128]{1,0:T(8,128)}', space=vmem, size = 0x3000, scoped, tag = 'scratch operand']
  #allocation10 [shape = 's32[]', space=sflag, size = 0x4, offset = 0, fixed_abs, tag = 'sflag constant byte address 0x0 - dummy sync flag']
  #allocation11 [shape = 's32[]', space=sflag, size = 0x4, offset = 0, fixed_abs, tag = 'sflag constant byte address 0x0 - dummy sync flag']
  #allocation12 [shape = 'u32[]', space=smem, size = 0x4, offset = 0x44, fixed_abs, tag = 'smem constant byte address 0x44 - assertion arg 0']
  #allocation13 [shape = 'u32[]', space=smem, size = 0x4, offset = 0x48, fixed_abs, tag = 'smem constant byte address 0x48 - assertion arg 1']
  %s0 = inlined_call_operand.hbm [shape: f32[2,24,128], index: 0, kind: input, shape index: {}]
  %s1 = inlined_call_operand.hbm [shape: f32[7,128,128], index: 1, kind: input, shape index: {}]
  %s2 = inlined_call_operand.vmem [shape: f32[1,128], index: 2, kind: input, shape index: {}]
  %s3 = inlined_call_operand.vmem [shape: f32[1,128], index: 3, kind: input, shape index: {}]
  %s4 = inlined_call_operand.vmem [shape: f32[2], index: 4, kind: input, shape index: {}]
  %s5 = inlined_call_operand.hbm [shape: f32[2,16,128], index: 5, kind: output, shape index: {}]
  %s6 = sld [smem:[#allocation0]]
  $region66: #{tpu_custom_call.1} parent=0
    _
  %s8 = ssub.s32 1, %s6
  %s9 = scalar_select 0, %s8, %s6
  $region1: #{tpu_custom_call.1} parent=0
    #allocation3 [shape = 'u8[458752]{0}', space=vmem, size = 0x70000, scoped, tag = 'input window, operand 1, single buffered']
    #allocation4 [shape = 's32[2]{0}', space=sflag, size = 0x8, scoped, tag = 'scoped memory for tpu_custom_call.1']
    #allocation5 [shape = 's32[2]{0}', space=sflag, size = 0x8, scoped, tag = 'scoped memory for tpu_custom_call.1']
    #allocation6 [shape = 's32[2]{0}', space=sflag, size = 0x8, scoped, tag = 'scoped memory for tpu_custom_call.1']
    #allocation7 [shape = 'u8[512]{0}', space=smem, size = 0x200, scoped, tag = 'input window, operand 4, single buffered']
    #allocation8 [shape = 'u8[16384]{0}', space=vmem, size = 0x4000, scoped, tag = 'output window, operand 0']
    %10 = vsyncpa [#allocation4], 0
    %11 = vsyncpa [#allocation6], 0
    %12 = vsyncpa [#allocation5], 0
    %s13 = scalar_lea.sflag [#allocation5], 1
    %14 = vsyncpa %s13, 0
    loop: start=0, step=1, limit=4
    $region2: #{tpu_custom_call.1} parent=1 // loop_pre_header
      _
    $region3: #{tpu_custom_call.1} parent=1 // loop_header
      %s16 = sphi 0, %s20
      %p17 = scmp.ge.s32.totalorder %s16, 4
      %s23 = sphi 0, %s42
      %s24 = sphi 0, %s38
      %s25 = sphi 0, %s34
      %s26 = sphi 0, %s23
      %s27 = sphi 0, %s24
      %s28 = sphi 0, %s25
      %s29 = sphi 0, %s26
      %s30 = sphi 0, %s27
      %s31 = sphi 0, %s28
      %s45 = sphi 0, %s47
      %s48 = sphi 0, %s45
      %s49 = sphi 0, %s48
      %s65 = sphi 0, %s49
      %s71 = sphi 0, %s73
      %s74 = sphi 0, %s71
      %s75 = sphi 0, %s74
      %s91 = sphi 0, %s75
      %s97 = sphi 0, %s99
      %s100 = sphi 0, %s97
      %s101 = sphi 0, %s100
      %s117 = sphi 0, %s101
      %s121 = sphi 0, %s121
      %s123 = sphi 0, %s121
      %s124 = sphi 0, %s123
      %s138 = sphi 0, %s124
      %s148 = sphi 0, %s150
      %s151 = sphi 0, %s148
      %s152 = sphi 0, %s151
      %s168 = sphi 0, %s152
    $region4: #{tpu_custom_call.1} parent=1 // loop_header_branch
      %19 = sbr.rel (%p17) target = $region8
    $region5: #{tpu_custom_call.1} parent=1 // loop_body
      %s21 = ssub.s32 %s16, 1
      %s22 = ssub.s32 %s16, 2
      %s32 = sadd.s32 1, %s25
      %p33 = scmp.ge.s32.totalorder %s32, 1
      %s34 = scalar_select %p33, 0, %s32
      %s35 = sadd.s32 1, %s24
      %s36 = scalar_select %p33, %s35, %s24
      %p37 = scmp.ge.s32.totalorder %s36, 1
      %s38 = scalar_select %p37, 0, %s36
      %s39 = sadd.s32 1, %s23
      %s40 = scalar_select %p37, %s39, %s23
      %p41 = scmp.ge.s32.totalorder %s40, 2
      %s42 = scalar_select %p41, 0, %s40
      %s43 = ssub.s32 %s25, %s34
      %p44 = scmp.eq.s32.totalorder %s43, 0
      %s46 = sadd.s32 %s45, 1
      %s47 = scalar_select %p44, %s45, %s46
      %p50 = pneg %p44
      %p51 = scmp.eq.s32.totalorder %s16, 1
      %p52 = por %p50, %p51
      %p53 = scmp.ne.s32.totalorder %s45, %s48
      %p54 = scmp.eq.s32.totalorder %s16, 0
      %p55 = por %p53, %p54
      %p56 = scmp.ne.s32.totalorder %s45, %s48
      %p57 = scmp.eq.s32.totalorder %s21, 1
      %p58 = por %p56, %p57
      %p59 = scmp.ne.s32.totalorder %s48, %s49
      %p60 = scmp.eq.s32.totalorder %s21, 0
      %p61 = por %p59, %p60
      %p62 = scmp.ne.s32.totalorder %s48, %s49
      %p63 = scmp.eq.s32.totalorder %s22, 1
      %p64 = por %p62, %p63
      %p66 = scmp.ne.s32.totalorder %s49, %s65
      %p67 = scmp.eq.s32.totalorder %s22, 0
      %p68 = por %p66, %p67
      %s69 = ssub.s32 %s25, %s34
      %p70 = scmp.eq.s32.totalorder %s69, 0
      %s72 = sadd.s32 %s71, 1
      %s73 = scalar_select %p70, %s71, %s72
      %p76 = pneg %p70
      %p77 = scmp.eq.s32.totalorder %s16, 1
      %p78 = por %p76, %p77
      %p79 = scmp.ne.s32.totalorder %s71, %s74
      %p80 = scmp.eq.s32.totalorder %s16, 0
      %p81 = por %p79, %p80
      %p82 = scmp.ne.s32.totalorder %s71, %s74
      %p83 = scmp.eq.s32.totalorder %s21, 1
      %p84 = por %p82, %p83
      %p85 = scmp.ne.s32.totalorder %s74, %s75
      %p86 = scmp.eq.s32.totalorder %s21, 0
      %p87 = por %p85, %p86
      %p88 = scmp.ne.s32.totalorder %s74, %s75
      %p89 = scmp.eq.s32.totalorder %s22, 1
      %p90 = por %p88, %p89
      %p92 = scmp.ne.s32.totalorder %s75, %s91
      %p93 = scmp.eq.s32.totalorder %s22, 0
      %p94 = por %p92, %p93
      %s95 = ssub.s32 %s25, %s34
      %p96 = scmp.eq.s32.totalorder %s95, 0
      %s98 = sadd.s32 %s97, 1
      %s99 = scalar_select %p96, %s97, %s98
      %p102 = pneg %p96
      %p103 = scmp.eq.s32.totalorder %s16, 1
      %p104 = por %p102, %p103
      %p105 = scmp.ne.s32.totalorder %s97, %s100
      %p106 = scmp.eq.s32.totalorder %s16, 0
      %p107 = por %p105, %p106
      %p108 = scmp.ne.s32.totalorder %s97, %s100
      %p109 = scmp.eq.s32.totalorder %s21, 1
      %p110 = por %p108, %p109
      %p111 = scmp.ne.s32.totalorder %s100, %s101
      %p112 = scmp.eq.s32.totalorder %s21, 0
      %p113 = por %p111, %p112
      %p114 = scmp.ne.s32.totalorder %s100, %s101
      %p115 = scmp.eq.s32.totalorder %s22, 1
      %p116 = por %p114, %p115
      %p118 = scmp.ne.s32.totalorder %s101, %s117
      %p119 = scmp.eq.s32.totalorder %s22, 0
      %p120 = por %p118, %p119
      %s122 = sadd.s32 %s121, 1
      %p125 = scmp.eq.s32.totalorder %s16, 1
      %p126 = scmp.ne.s32.totalorder %s121, %s123
      %p127 = scmp.eq.s32.totalorder %s16, 0
      %p128 = por %p126, %p127
      %p129 = scmp.ne.s32.totalorder %s121, %s123
      %p130 = scmp.eq.s32.totalorder %s21, 1
      %p131 = por %p129, %p130
      %p132 = scmp.ne.s32.totalorder %s123, %s124
      %p133 = scmp.eq.s32.totalorder %s21, 0
      %p134 = por %p132, %p133
      %p135 = scmp.ne.s32.totalorder %s123, %s124
      %p136 = scmp.eq.s32.totalorder %s22, 1
      %p137 = por %p135, %p136
      %p139 = scmp.ne.s32.totalorder %s124, %s138
      %p140 = scmp.eq.s32.totalorder %s22, 0
      %p141 = por %p139, %p140
      %s142 = ssub.s32 %s23, %s42
      %s143 = ssub.s32 %s24, %s38
      %s144 = sor.u32 %s142, %s143
      %s145 = ssub.s32 %s25, %s34
      %s146 = sor.u32 %s144, %s145
      %p147 = scmp.eq.s32.totalorder %s146, 0
      %s149 = sadd.s32 %s148, 1
      %s150 = scalar_select %p147, %s148, %s149
      %p153 = pneg %p147
      %p154 = scmp.eq.s32.totalorder %s16, 1
      %p155 = por %p153, %p154
      %p156 = scmp.ne.s32.totalorder %s148, %s151
      %p157 = scmp.eq.s32.totalorder %s16, 0
      %p158 = por %p156, %p157
      %p159 = scmp.ne.s32.totalorder %s148, %s151
      %p160 = scmp.eq.s32.totalorder %s21, 1
      %p161 = por %p159, %p160
      %p162 = scmp.ne.s32.totalorder %s151, %s152
      %p163 = scmp.eq.s32.totalorder %s21, 0
      %p164 = por %p162, %p163
      %p165 = scmp.ne.s32.totalorder %s151, %s152
      %p166 = scmp.eq.s32.totalorder %s22, 1
      %p167 = por %p165, %p166
      %p169 = scmp.ne.s32.totalorder %s152, %s168
      %p170 = scmp.eq.s32.totalorder %s22, 0
      %p171 = por %p169, %p170
      %p172 = scmp.le.s32.totalorder 1, %s16
      %p173 = scmp.lt.s32.totalorder %s16, 3
      %p174 = pnand %p172, %p173
      %p175 = pneg %p174
      // Predicated region
      $region9: #{tpu_custom_call.1} parent=5 // pred_check
        _
      $region10: #{tpu_custom_call.1} parent=5 // pred_check_branch
        %177 = sbr.rel (%p174) target = $region12
      $region11: #{tpu_custom_call.1} parent=5 // pred_region
        %s178 = ssub.s32 %s16, 1
        // Predicated region
        $region13: #{tpu_custom_call.1} parent=11 // pred_check
          %p179 = pneg %p61
        $region14: #{tpu_custom_call.1} parent=11 // pred_check_branch
          %181 = sbr.rel (%p179) target = $region16
        $region15: #{tpu_custom_call.1} parent=11 // pred_region
          %s183 = ssub.s32 14336, 14336
          %184 = vsyncadd [#allocation4], %s183
          %s185 = smul.addr %s28, 128
          %s186 = scalar_lea.hbm %s1, %s185
          %s187 = sshll.u32 [#allocation3], 4
          %s188 = int_to_ptr.vmem [resolvable:$true] %s187
          %193 = dma.hbm_to_vmem [thread:$0]  %s186, 14336, %s188, [#allocation4], 128, 128, 8
        $region16: #{tpu_custom_call.1} parent=11 // pred_fallthru
          _
        // Predicated region
        $region17: #{tpu_custom_call.1} parent=11 // pred_check
          %p194 = pneg %p87
        $region18: #{tpu_custom_call.1} parent=11 // pred_check_branch
          %196 = sbr.rel (%p194) target = $region20
        $region19: #{tpu_custom_call.1} parent=11 // pred_region
          %p197 = scmp.lt.s32.totalorder %s28, 0
          %s198 = scalar_select %p197, %s28, 0
          %s199 = scalar_lea.vmem %s2, %s198
        $region20: #{tpu_custom_call.1} parent=11 // pred_fallthru
          _
        // Predicated region
        $region21: #{tpu_custom_call.1} parent=11 // pred_check
          %p200 = pneg %p113
        $region22: #{tpu_custom_call.1} parent=11 // pred_check_branch
          %202 = sbr.rel (%p200) target = $region24
        $region23: #{tpu_custom_call.1} parent=11 // pred_region
          %p203 = scmp.lt.s32.totalorder %s28, 0
          %s204 = scalar_select %p203, %s28, 0
          %s205 = scalar_lea.vmem %s3, %s204
        $region24: #{tpu_custom_call.1} parent=11 // pred_fallthru
          _
        // Predicated region
        $region25: #{tpu_custom_call.1} parent=11 // pred_check
          %p206 = pneg %p134
        $region26: #{tpu_custom_call.1} parent=11 // pred_check_branch
          %208 = sbr.rel (%p206) target = $region28
        $region27: #{tpu_custom_call.1} parent=11 // pred_region
          %s210 = ssub.s32 16, 16
          %211 = vsyncadd [#allocation6], %s210
          %s213 = sshll.u32 %s4, 4
          %s214 = int_to_ptr.vmem [resolvable:$true] %s213
          %216 = dma.vmem_to_smem %s214, 16, [#allocation7], [#allocation6]
        $region28: #{tpu_custom_call.1} parent=11 // pred_fallthru
          _
      $region12: #{tpu_custom_call.1} parent=5 // pred_fallthru
        _
      %p217 = scmp.lt.s32.totalorder %s16, 2
      // Predicated region
      $region29: #{tpu_custom_call.1} parent=5 // pred_check
        %p218 = pneg %p217
      $region30: #{tpu_custom_call.1} parent=5 // pred_check_branch
        %220 = sbr.rel (%p218) target = $region32
      $region31: #{tpu_custom_call.1} parent=5 // pred_region
        _
      $region32: #{tpu_custom_call.1} parent=5 // pred_fallthru
        _
      %p221 = scmp.le.s32.totalorder 1, %s16
      %p222 = scmp.lt.s32.totalorder %s16, 3
      %p223 = pnand %p221, %p222
      %p224 = pneg %p223
      // Predicated region
      $region33: #{tpu_custom_call.1} parent=5 // pred_check
        _
      $region34: #{tpu_custom_call.1} parent=5 // pred_check_branch
        %226 = sbr.rel (%p223) target = $region36
      $region35: #{tpu_custom_call.1} parent=5 // pred_region
        %s227 = ssub.s32 %s16, 1
        // Predicated region
        $region37: #{tpu_custom_call.1} parent=35 // pred_check
          %p228 = pneg %p61
        $region38: #{tpu_custom_call.1} parent=35 // pred_check_branch
          %230 = sbr.rel (%p228) target = $region40
        $region39: #{tpu_custom_call.1} parent=35 // pred_region
          %231 = dma.done [#allocation4], 14336
        $region40: #{tpu_custom_call.1} parent=35 // pred_fallthru
          _
        // Predicated region
        $region41: #{tpu_custom_call.1} parent=35 // pred_check
          %p232 = pneg %p134
        $region42: #{tpu_custom_call.1} parent=35 // pred_check_branch
          %234 = sbr.rel (%p232) target = $region44
        $region43: #{tpu_custom_call.1} parent=35 // pred_region
          %235 = dma.done [#allocation6], 16
        $region44: #{tpu_custom_call.1} parent=35 // pred_fallthru
          _
        %236 = sfence
        %p237 = pneg %p61
        %p238 = pneg %p58
        %p239 = scmp.lt.s32.totalorder %s28, 0
        %s240 = scalar_select %p239, %s28, 0
        %s241 = scalar_lea.vmem %s2, %s240
        %p242 = pneg %p87
        %p243 = pneg %p84
        %p244 = scmp.lt.s32.totalorder %s28, 0
        %s245 = scalar_select %p244, %s28, 0
        %s246 = scalar_lea.vmem %s3, %s245
        %p247 = pneg %p113
        %p248 = pneg %p110
        %p249 = pneg %p134
        %p250 = pneg %p131
        %p251 = pneg %p164
        %p252 = pneg %p161
        %s253 = sand.u32 %s151, 1
        %s254 = scalar_lea.sflag [#allocation5], %s253
        %s255 = sand.u32 %s151, 1
        %s256 = smul.addr %s255, 16
        %s257 = scalar_lea.vmem [#allocation8], %s256
        %p258 = scmp.lt.s32.totalorder %s28, 0
        %s259 = scalar_select %p258, %s28, 0
        %s260 = scalar_lea.vmem %s2, %s259
        %p261 = scmp.lt.s32.totalorder %s28, 0
        %s262 = scalar_select %p261, %s28, 0
        %s263 = scalar_lea.vmem %s3, %s262
        %s264 = smul.u32 2, %s27
        %p265 = scmp.eq.s32.totalorder %s28, 0
        // Predicated region
        $region45: #{tpu_custom_call.1} parent=35 // pred_check
          %p266 = pneg %p265
        $region46: #{tpu_custom_call.1} parent=35 // pred_check_branch
          %268 = sbr.rel (%p266) target = $region48
        $region47: #{tpu_custom_call.1} parent=35 // pred_region
          %s269 = smul.u32 %s27, 16
          $region49: #{tpu_custom_call.1} parent=47
            #allocation9 [shape = 's32[1]{0}', space=sflag, size = 0x4, scoped, tag = 'scoped memory for tpu_custom_call.1']
            %s270 = smul.u32 %s26, 24
            %s271 = sadd.s32 %s269, %s270
            %s272 = smul.addr %s271, 16
            %s273 = scalar_lea.hbm %s0, %s272
            // Predicated region
            $region50: #{tpu_custom_call.1} parent=49 // pred_check
              _
            $region51: #{tpu_custom_call.1} parent=49 // pred_check_branch
              %275 = sbr.rel target = $region53
            $region52: #{tpu_custom_call.1} parent=49 // pred_region
              %276 = sst [smem:[#allocation12]] [#allocation11]
              %277 = sst [smem:[#allocation13]] [#allocation10]
            $region53: #{tpu_custom_call.1} parent=49 // pred_fallthru
              _
            %279 = shalt.err (0)
            %s281 = sshll.u32 [#allocation2], 4
            %s282 = int_to_ptr.vmem [resolvable:$true] %s281
            %284 = dma.hbm_to_vmem [thread:$0]  %s273, 384, %s282, [#allocation9]
            %s285 = smul.u32 24, 1
            %s286 = sshll.u32 %s285, 4
            %287 = dma.done [#allocation9], %s286
        $region48: #{tpu_custom_call.1} parent=35 // pred_fallthru
          _
        %v288 = vld [vmem:[#allocation2] sm:$0xff]
        %v289 = vld [vmem:[#allocation2 + $0x8] sm:$0xff]
        %v290 = vld [vmem:[#allocation3] sm:$0xff]
        %v291 = vld [vmem:[#allocation3 + $0x8] sm:$0xff]
        %v292 = vld [vmem:[#allocation3 + $0x10] sm:$0xff]
        %v293 = vld [vmem:[#allocation3 + $0x18] sm:$0xff]
        %v294 = vld [vmem:[#allocation3 + $0x20] sm:$0xff]
        %v295 = vld [vmem:[#allocation3 + $0x28] sm:$0xff]
        %v296 = vld [vmem:[#allocation3 + $0x30] sm:$0xff]
        %v297 = vld [vmem:[#allocation3 + $0x38] sm:$0xff]
        %v298 = vld [vmem:[#allocation3 + $0x40] sm:$0xff]
        %v299 = vld [vmem:[#allocation3 + $0x48] sm:$0xff]
        %v300 = vld [vmem:[#allocation3 + $0x50] sm:$0xff]
        %v301 = vld [vmem:[#allocation3 + $0x58] sm:$0xff]
        %v302 = vld [vmem:[#allocation3 + $0x60] sm:$0xff]
        %v303 = vld [vmem:[#allocation3 + $0x68] sm:$0xff]
        %v304 = vld [vmem:[#allocation3 + $0x70] sm:$0xff]
        %v305 = vld [vmem:[#allocation3 + $0x78] sm:$0xff]
        %v306 = vld [vmem:[#allocation2 + $0x1] sm:$0xff]
        %v307 = vld [vmem:[#allocation2 + $0x9] sm:$0xff]
        %s308 = scalar_lea.vmem [#allocation3], 128
        %v309 = vld [vmem:[%s308] sm:$0xff]
        %v310 = vld [vmem:[%s308 + $0x8] sm:$0xff]
        %v311 = vld [vmem:[%s308 + $0x10] sm:$0xff]
        %v312 = vld [vmem:[%s308 + $0x18] sm:$0xff]
        %v313 = vld [vmem:[%s308 + $0x20] sm:$0xff]
        %v314 = vld [vmem:[%s308 + $0x28] sm:$0xff]
        %v315 = vld [vmem:[%s308 + $0x30] sm:$0xff]
        %v316 = vld [vmem:[%s308 + $0x38] sm:$0xff]
        %v317 = vld [vmem:[%s308 + $0x40] sm:$0xff]
        %v318 = vld [vmem:[%s308 + $0x48] sm:$0xff]
        %v319 = vld [vmem:[%s308 + $0x50] sm:$0xff]
        %v320 = vld [vmem:[%s308 + $0x58] sm:$0xff]
        %v321 = vld [vmem:[%s308 + $0x60] sm:$0xff]
        %v322 = vld [vmem:[%s308 + $0x68] sm:$0xff]
        %v323 = vld [vmem:[%s308 + $0x70] sm:$0xff]
        %v324 = vld [vmem:[%s308 + $0x78] sm:$0xff]
        %325 = vmatprep.subr.mxu0 0.0
        %326 = vmatpush1.msra.mxu0 %v309
        %327 = vmatprep.subr.mxu0 0.0
        %328 = vmatpush1.msra.mxu0 %v310
        %329 = vmatprep.subr.mxu0 0.0
        %330 = vmatpush1.msra.mxu0 %v311
        %331 = vmatprep.subr.mxu0 0.0
        %332 = vmatpush1.msra.mxu0 %v312
        %333 = vmatprep.subr.mxu0 0.0
        %334 = vmatpush1.msra.mxu0 %v313
        %335 = vmatprep.subr.mxu0 0.0
        %336 = vmatpush1.msra.mxu0 %v314
        %337 = vmatprep.subr.mxu0 0.0
        %338 = vmatpush1.msra.mxu0 %v315
        %339 = vmatprep.subr.mxu0 0.0
        %340 = vmatpush1.msra.mxu0 %v316
        %341 = vmatprep.subr.mxu0 0.0
        %342 = vmatpush1.msra.mxu0 %v317
        %343 = vmatprep.subr.mxu0 0.0
        %344 = vmatpush1.msra.mxu0 %v318
        %345 = vmatprep.subr.mxu0 0.0
        %346 = vmatpush1.msra.mxu0 %v319
        %347 = vmatprep.subr.mxu0 0.0
        %348 = vmatpush1.msra.mxu0 %v320
        %349 = vmatprep.subr.mxu0 0.0
        %350 = vmatpush1.msra.mxu0 %v321
        %351 = vmatprep.subr.mxu0 0.0
        %352 = vmatpush1.msra.mxu0 %v322
        %353 = vmatprep.subr.mxu0 0.0
        %354 = vmatpush1.msra.mxu0 %v323
        %355 = vmatprep.subr.mxu0 0.0
        %356 = vmatpush1.msra.mxu0 %v324
        %357 = vmatprep.subr.mxu0 0.0
        %358 = vmatpush1.msra.mxu0 0.0
        %359 = vmatprep.subr.mxu0 0.0
        %360 = vmatpush1.msra.mxu0 0.0
        %361 = vmatprep.subr.mxu0 0.0
        %362 = vmatpush1.msra.mxu0 0.0
        %363 = vmatprep.subr.mxu0 0.0
        %364 = vmatpush1.msra.mxu0 0.0
        %365 = vmatprep.subr.mxu0 0.0
        %366 = vmatpush1.msra.mxu0 0.0
        %367 = vmatprep.subr.mxu0 0.0
        %368 = vmatpush1.msra.mxu0 0.0
        %369 = vmatprep.subr.mxu0 0.0
        %370 = vmatpush1.msra.mxu0 0.0
        %371 = vmatprep.subr.mxu0 0.0
        %372 = vmatpush1.msra.mxu0 0.0
        %373 = vmatprep.subr.mxu0 0.0
        %374 = vmatpush1.msra.mxu0 0.0
        %375 = vmatprep.subr.mxu0 0.0
        %376 = vmatpush1.msra.mxu0 0.0
        %377 = vmatprep.subr.mxu0 0.0
        %378 = vmatpush1.msra.mxu0 0.0
        %379 = vmatprep.subr.mxu0 0.0
        %380 = vmatpush1.msra.mxu0 0.0
        %381 = vmatprep.subr.mxu0 0.0
        %382 = vmatpush1.msra.mxu0 0.0
        %383 = vmatprep.subr.mxu0 0.0
        %384 = vmatpush1.msra.mxu0 0.0
        %385 = vmatprep.subr.mxu0 0.0
        %386 = vmatpush1.msra.mxu0 0.0
        %387 = vmatprep.subr.mxu0 0.0
        %388 = vmatpush1.msra.mxu0 0.0
        %389 = vmatprep.mubr.f32.mxu0 0.0
        %390 = vmatmul.mubr.f32.gmra.mrb[0].mxu0 %v306
        %v391 = vpop.f32.mrb[0].mxu0
        %v392 = vadd.f32 0.0, %v391
        %v393 = vpop.f32.mrb[0].mxu0
        %394 = vmatprep.mubr.f32.mxu0 0.0
        %395 = vmatmul.mubr.f32.gmra.mrb[0].mxu0 %v307
        %v396 = vpop.f32.mrb[0].mxu0
        %v397 = vadd.f32 0.0, %v396
        %v398 = vpop.f32.mrb[0].mxu0
        %399 = vdwg.mxu0
        %400 = vmatprep.subr.mxu0 0.0
        %401 = vmatpush1.msra.mxu0 %v290
        %402 = vmatprep.subr.mxu0 0.0
        %403 = vmatpush1.msra.mxu0 %v291
        %404 = vmatprep.subr.mxu0 0.0
        %405 = vmatpush1.msra.mxu0 %v292
        %406 = vmatprep.subr.mxu0 0.0
        %407 = vmatpush1.msra.mxu0 %v293
        %408 = vmatprep.subr.mxu0 0.0
        %409 = vmatpush1.msra.mxu0 %v294
        %410 = vmatprep.subr.mxu0 0.0
        %411 = vmatpush1.msra.mxu0 %v295
        %412 = vmatprep.subr.mxu0 0.0
        %413 = vmatpush1.msra.mxu0 %v296
        %414 = vmatprep.subr.mxu0 0.0
        %415 = vmatpush1.msra.mxu0 %v297
        %416 = vmatprep.subr.mxu0 0.0
        %417 = vmatpush1.msra.mxu0 %v298
        %418 = vmatprep.subr.mxu0 0.0
        %419 = vmatpush1.msra.mxu0 %v299
        %420 = vmatprep.subr.mxu0 0.0
        %421 = vmatpush1.msra.mxu0 %v300
        %422 = vmatprep.subr.mxu0 0.0
        %423 = vmatpush1.msra.mxu0 %v301
        %424 = vmatprep.subr.mxu0 0.0
        %425 = vmatpush1.msra.mxu0 %v302
        %426 = vmatprep.subr.mxu0 0.0
        %427 = vmatpush1.msra.mxu0 %v303
        %428 = vmatprep.subr.mxu0 0.0
        %429 = vmatpush1.msra.mxu0 %v304
        %430 = vmatprep.subr.mxu0 0.0
        %431 = vmatpush1.msra.mxu0 %v305
        %432 = vmatprep.subr.mxu0 0.0
        %433 = vmatpush1.msra.mxu0 0.0
        %434 = vmatprep.subr.mxu0 0.0
        %435 = vmatpush1.msra.mxu0 0.0
        %436 = vmatprep.subr.mxu0 0.0
        %437 = vmatpush1.msra.mxu0 0.0
        %438 = vmatprep.subr.mxu0 0.0
        %439 = vmatpush1.msra.mxu0 0.0
        %440 = vmatprep.subr.mxu0 0.0
        %441 = vmatpush1.msra.mxu0 0.0
        %442 = vmatprep.subr.mxu0 0.0
        %443 = vmatpush1.msra.mxu0 0.0
        %444 = vmatprep.subr.mxu0 0.0
        %445 = vmatpush1.msra.mxu0 0.0
        %446 = vmatprep.subr.mxu0 0.0
        %447 = vmatpush1.msra.mxu0 0.0
        %448 = vmatprep.subr.mxu0 0.0
        %449 = vmatpush1.msra.mxu0 0.0
        %450 = vmatprep.subr.mxu0 0.0
        %451 = vmatpush1.msra.mxu0 0.0
        %452 = vmatprep.subr.mxu0 0.0
        %453 = vmatpush1.msra.mxu0 0.0
        %454 = vmatprep.subr.mxu0 0.0
        %455 = vmatpush1.msra.mxu0 0.0
        %456 = vmatprep.subr.mxu0 0.0
        %457 = vmatpush1.msra.mxu0 0.0
        %458 = vmatprep.subr.mxu0 0.0
        %459 = vmatpush1.msra.mxu0 0.0
        %460 = vmatprep.subr.mxu0 0.0
        %461 = vmatpush1.msra.mxu0 0.0
        %462 = vmatprep.subr.mxu0 0.0
        %463 = vmatpush1.msra.mxu0 0.0
        %464 = vmatprep.mubr.f32.mxu0 0.0
        %465 = vmatmul.mubr.f32.gmra.mrb[0].mxu0 %v288
        %v466 = vpop.f32.mrb[0].mxu0
        %v467 = vadd.f32 %v392, %v466
        %v468 = vpop.f32.mrb[0].mxu0
        %469 = vmatprep.mubr.f32.mxu0 0.0
        %470 = vmatmul.mubr.f32.gmra.mrb[0].mxu0 %v289
        %v471 = vpop.f32.mrb[0].mxu0
        %v472 = vadd.f32 %v397, %v471
        %v473 = vpop.f32.mrb[0].mxu0
        %474 = vdwg.mxu0
        %v475 = vld [vmem:[#allocation2 + $0x2] sm:$0xff]
        %v476 = vld [vmem:[#allocation2 + $0xa] sm:$0xff]
        %s477 = scalar_lea.vmem [#allocation3], 256
        %v478 = vld [vmem:[%s477] sm:$0xff]
        %v479 = vld [vmem:[%s477 + $0x8] sm:$0xff]
        %v480 = vld [vmem:[%s477 + $0x10] sm:$0xff]
        %v481 = vld [vmem:[%s477 + $0x18] sm:$0xff]
        %v482 = vld [vmem:[%s477 + $0x20] sm:$0xff]
        %v483 = vld [vmem:[%s477 + $0x28] sm:$0xff]
        %v484 = vld [vmem:[%s477 + $0x30] sm:$0xff]
        %v485 = vld [vmem:[%s477 + $0x38] sm:$0xff]
        %v486 = vld [vmem:[%s477 + $0x40] sm:$0xff]
        %v487 = vld [vmem:[%s477 + $0x48] sm:$0xff]
        %v488 = vld [vmem:[%s477 + $0x50] sm:$0xff]
        %v489 = vld [vmem:[%s477 + $0x58] sm:$0xff]
        %v490 = vld [vmem:[%s477 + $0x60] sm:$0xff]
        %v491 = vld [vmem:[%s477 + $0x68] sm:$0xff]
        %v492 = vld [vmem:[%s477 + $0x70] sm:$0xff]
        %v493 = vld [vmem:[%s477 + $0x78] sm:$0xff]
        %494 = vmatprep.subr.mxu0 0.0
        %495 = vmatpush1.msra.mxu0 %v478
        %496 = vmatprep.subr.mxu0 0.0
        %497 = vmatpush1.msra.mxu0 %v479
        %498 = vmatprep.subr.mxu0 0.0
        %499 = vmatpush1.msra.mxu0 %v480
        %500 = vmatprep.subr.mxu0 0.0
        %501 = vmatpush1.msra.mxu0 %v481
        %502 = vmatprep.subr.mxu0 0.0
        %503 = vmatpush1.msra.mxu0 %v482
        %504 = vmatprep.subr.mxu0 0.0
        %505 = vmatpush1.msra.mxu0 %v483
        %506 = vmatprep.subr.mxu0 0.0
        %507 = vmatpush1.msra.mxu0 %v484
        %508 = vmatprep.subr.mxu0 0.0
        %509 = vmatpush1.msra.mxu0 %v485
        %510 = vmatprep.subr.mxu0 0.0
        %511 = vmatpush1.msra.mxu0 %v486
        %512 = vmatprep.subr.mxu0 0.0
        %513 = vmatpush1.msra.mxu0 %v487
        %514 = vmatprep.subr.mxu0 0.0
        %515 = vmatpush1.msra.mxu0 %v488
        %516 = vmatprep.subr.mxu0 0.0
        %517 = vmatpush1.msra.mxu0 %v489
        %518 = vmatprep.subr.mxu0 0.0
        %519 = vmatpush1.msra.mxu0 %v490
        %520 = vmatprep.subr.mxu0 0.0
        %521 = vmatpush1.msra.mxu0 %v491
        %522 = vmatprep.subr.mxu0 0.0
        %523 = vmatpush1.msra.mxu0 %v492
        %524 = vmatprep.subr.mxu0 0.0
        %525 = vmatpush1.msra.mxu0 %v493
        %526 = vmatprep.subr.mxu0 0.0
        %527 = vmatpush1.msra.mxu0 0.0
        %528 = vmatprep.subr.mxu0 0.0
        %529 = vmatpush1.msra.mxu0 0.0
        %530 = vmatprep.subr.mxu0 0.0
        %531 = vmatpush1.msra.mxu0 0.0
        %532 = vmatprep.subr.mxu0 0.0
        %533 = vmatpush1.msra.mxu0 0.0
        %534 = vmatprep.subr.mxu0 0.0
        %535 = vmatpush1.msra.mxu0 0.0
        %536 = vmatprep.subr.mxu0 0.0
        %537 = vmatpush1.msra.mxu0 0.0
        %538 = vmatprep.subr.mxu0 0.0
        %539 = vmatpush1.msra.mxu0 0.0
        %540 = vmatprep.subr.mxu0 0.0
        %541 = vmatpush1.msra.mxu0 0.0
        %542 = vmatprep.subr.mxu0 0.0
        %543 = vmatpush1.msra.mxu0 0.0
        %544 = vmatprep.subr.mxu0 0.0
        %545 = vmatpush1.msra.mxu0 0.0
        %546 = vmatprep.subr.mxu0 0.0
        %547 = vmatpush1.msra.mxu0 0.0
        %548 = vmatprep.subr.mxu0 0.0
        %549 = vmatpush1.msra.mxu0 0.0
        %550 = vmatprep.subr.mxu0 0.0
        %551 = vmatpush1.msra.mxu0 0.0
        %552 = vmatprep.subr.mxu0 0.0
        %553 = vmatpush1.msra.mxu0 0.0
        %554 = vmatprep.subr.mxu0 0.0
        %555 = vmatpush1.msra.mxu0 0.0
        %556 = vmatprep.subr.mxu0 0.0
        %557 = vmatpush1.msra.mxu0 0.0
        %558 = vmatprep.mubr.f32.mxu0 0.0
        %559 = vmatmul.mubr.f32.gmra.mrb[0].mxu0 %v475
        %v560 = vpop.f32.mrb[0].mxu0
        %v561 = vadd.f32 0.0, %v560
        %v562 = vpop.f32.mrb[0].mxu0
        %563 = vmatprep.mubr.f32.mxu0 0.0
        %564 = vmatmul.mubr.f32.gmra.mrb[0].mxu0 %v476
        %v565 = vpop.f32.mrb[0].mxu0
        %v566 = vadd.f32 0.0, %v565
        %v567 = vpop.f32.mrb[0].mxu0
        %568 = vdwg.mxu0
        %v569 = vadd.f32 %v467, %v561
        %v570 = vadd.f32 %v472, %v566
        %v571 = vld [vmem:[#allocation2 + $0x3] sm:$0xff]
        %v572 = vld [vmem:[#allocation2 + $0xb] sm:$0xff]
        %s573 = scalar_lea.vmem [#allocation3], 384
        %v574 = vld [vmem:[%s573] sm:$0xff]
        %v575 = vld [vmem:[%s573 + $0x8] sm:$0xff]
        %v576 = vld [vmem:[%s573 + $0x10] sm:$0xff]
        %v577 = vld [vmem:[%s573 + $0x18] sm:$0xff]
        %v578 = vld [vmem:[%s573 + $0x20] sm:$0xff]
        %v579 = vld [vmem:[%s573 + $0x28] sm:$0xff]
        %v580 = vld [vmem:[%s573 + $0x30] sm:$0xff]
        %v581 = vld [vmem:[%s573 + $0x38] sm:$0xff]
        %v582 = vld [vmem:[%s573 + $0x40] sm:$0xff]
        %v583 = vld [vmem:[%s573 + $0x48] sm:$0xff]
        %v584 = vld [vmem:[%s573 + $0x50] sm:$0xff]
        %v585 = vld [vmem:[%s573 + $0x58] sm:$0xff]
        %v586 = vld [vmem:[%s573 + $0x60] sm:$0xff]
        %v587 = vld [vmem:[%s573 + $0x68] sm:$0xff]
        %v588 = vld [vmem:[%s573 + $0x70] sm:$0xff]
        %v589 = vld [vmem:[%s573 + $0x78] sm:$0xff]
        %590 = vmatprep.subr.mxu0 0.0
        %591 = vmatpush1.msra.mxu0 %v574
        %592 = vmatprep.subr.mxu0 0.0
        %593 = vmatpush1.msra.mxu0 %v575
        %594 = vmatprep.subr.mxu0 0.0
        %595 = vmatpush1.msra.mxu0 %v576
        %596 = vmatprep.subr.mxu0 0.0
        %597 = vmatpush1.msra.mxu0 %v577
        %598 = vmatprep.subr.mxu0 0.0
        %599 = vmatpush1.msra.mxu0 %v578
        %600 = vmatprep.subr.mxu0 0.0
        %601 = vmatpush1.msra.mxu0 %v579
        %602 = vmatprep.subr.mxu0 0.0
        %603 = vmatpush1.msra.mxu0 %v580
        %604 = vmatprep.subr.mxu0 0.0
        %605 = vmatpush1.msra.mxu0 %v581
        %606 = vmatprep.subr.mxu0 0.0
        %607 = vmatpush1.msra.mxu0 %v582
        %608 = vmatprep.subr.mxu0 0.0
        %609 = vmatpush1.msra.mxu0 %v583
        %610 = vmatprep.subr.mxu0 0.0
        %611 = vmatpush1.msra.mxu0 %v584
        %612 = vmatprep.subr.mxu0 0.0
        %613 = vmatpush1.msra.mxu0 %v585
        %614 = vmatprep.subr.mxu0 0.0
        %615 = vmatpush1.msra.mxu0 %v586
        %616 = vmatprep.subr.mxu0 0.0
        %617 = vmatpush1.msra.mxu0 %v587
        %618 = vmatprep.subr.mxu0 0.0
        %619 = vmatpush1.msra.mxu0 %v588
        %620 = vmatprep.subr.mxu0 0.0
        %621 = vmatpush1.msra.mxu0 %v589
        %622 = vmatprep.subr.mxu0 0.0
        %623 = vmatpush1.msra.mxu0 0.0
        %624 = vmatprep.subr.mxu0 0.0
        %625 = vmatpush1.msra.mxu0 0.0
        %626 = vmatprep.subr.mxu0 0.0
        %627 = vmatpush1.msra.mxu0 0.0
        %628 = vmatprep.subr.mxu0 0.0
        %629 = vmatpush1.msra.mxu0 0.0
        %630 = vmatprep.subr.mxu0 0.0
        %631 = vmatpush1.msra.mxu0 0.0
        %632 = vmatprep.subr.mxu0 0.0
        %633 = vmatpush1.msra.mxu0 0.0
        %634 = vmatprep.subr.mxu0 0.0
        %635 = vmatpush1.msra.mxu0 0.0
        %636 = vmatprep.subr.mxu0 0.0
        %637 = vmatpush1.msra.mxu0 0.0
        %638 = vmatprep.subr.mxu0 0.0
        %639 = vmatpush1.msra.mxu0 0.0
        %640 = vmatprep.subr.mxu0 0.0
        %641 = vmatpush1.msra.mxu0 0.0
        %642 = vmatprep.subr.mxu0 0.0
        %643 = vmatpush1.msra.mxu0 0.0
        %644 = vmatprep.subr.mxu0 0.0
        %645 = vmatpush1.msra.mxu0 0.0
        %646 = vmatprep.subr.mxu0 0.0
        %647 = vmatpush1.msra.mxu0 0.0
        %648 = vmatprep.subr.mxu0 0.0
        %649 = vmatpush1.msra.mxu0 0.0
        %650 = vmatprep.subr.mxu0 0.0
        %651 = vmatpush1.msra.mxu0 0.0
        %652 = vmatprep.subr.mxu0 0.0
        %653 = vmatpush1.msra.mxu0 0.0
        %654 = vmatprep.mubr.f32.mxu0 0.0
        %655 = vmatmul.mubr.f32.gmra.mrb[0].mxu0 %v571
        %v656 = vpop.f32.mrb[0].mxu0
        %v657 = vadd.f32 0.0, %v656
        %v658 = vpop.f32.mrb[0].mxu0
        %659 = vmatprep.mubr.f32.mxu0 0.0
        %660 = vmatmul.mubr.f32.gmra.mrb[0].mxu0 %v572
        %v661 = vpop.f32.mrb[0].mxu0
        %v662 = vadd.f32 0.0, %v661
        %v663 = vpop.f32.mrb[0].mxu0
        %664 = vdwg.mxu0
        %v665 = vadd.f32 %v569, %v657
        %v666 = vadd.f32 %v570, %v662
        %v667 = vld [vmem:[#allocation2 + $0x4] sm:$0xff]
        %v668 = vld [vmem:[#allocation2 + $0xc] sm:$0xff]
        %s669 = scalar_lea.vmem [#allocation3], 512
        %v670 = vld [vmem:[%s669] sm:$0xff]
        %v671 = vld [vmem:[%s669 + $0x8] sm:$0xff]
        %v672 = vld [vmem:[%s669 + $0x10] sm:$0xff]
        %v673 = vld [vmem:[%s669 + $0x18] sm:$0xff]
        %v674 = vld [vmem:[%s669 + $0x20] sm:$0xff]
        %v675 = vld [vmem:[%s669 + $0x28] sm:$0xff]
        %v676 = vld [vmem:[%s669 + $0x30] sm:$0xff]
        %v677 = vld [vmem:[%s669 + $0x38] sm:$0xff]
        %v678 = vld [vmem:[%s669 + $0x40] sm:$0xff]
        %v679 = vld [vmem:[%s669 + $0x48] sm:$0xff]
        %v680 = vld [vmem:[%s669 + $0x50] sm:$0xff]
        %v681 = vld [vmem:[%s669 + $0x58] sm:$0xff]
        %v682 = vld [vmem:[%s669 + $0x60] sm:$0xff]
        %v683 = vld [vmem:[%s669 + $0x68] sm:$0xff]
        %v684 = vld [vmem:[%s669 + $0x70] sm:$0xff]
        %v685 = vld [vmem:[%s669 + $0x78] sm:$0xff]
        %686 = vmatprep.subr.mxu0 0.0
        %687 = vmatpush1.msra.mxu0 %v670
        %688 = vmatprep.subr.mxu0 0.0
        %689 = vmatpush1.msra.mxu0 %v671
        %690 = vmatprep.subr.mxu0 0.0
        %691 = vmatpush1.msra.mxu0 %v672
        %692 = vmatprep.subr.mxu0 0.0
        %693 = vmatpush1.msra.mxu0 %v673
        %694 = vmatprep.subr.mxu0 0.0
        %695 = vmatpush1.msra.mxu0 %v674
        %696 = vmatprep.subr.mxu0 0.0
        %697 = vmatpush1.msra.mxu0 %v675
        %698 = vmatprep.subr.mxu0 0.0
        %699 = vmatpush1.msra.mxu0 %v676
        %700 = vmatprep.subr.mxu0 0.0
        %701 = vmatpush1.msra.mxu0 %v677
        %702 = vmatprep.subr.mxu0 0.0
        %703 = vmatpush1.msra.mxu0 %v678
        %704 = vmatprep.subr.mxu0 0.0
        %705 = vmatpush1.msra.mxu0 %v679
        %706 = vmatprep.subr.mxu0 0.0
        %707 = vmatpush1.msra.mxu0 %v680
        %708 = vmatprep.subr.mxu0 0.0
        %709 = vmatpush1.msra.mxu0 %v681
        %710 = vmatprep.subr.mxu0 0.0
        %711 = vmatpush1.msra.mxu0 %v682
        %712 = vmatprep.subr.mxu0 0.0
        %713 = vmatpush1.msra.mxu0 %v683
        %714 = vmatprep.subr.mxu0 0.0
        %715 = vmatpush1.msra.mxu0 %v684
        %716 = vmatprep.subr.mxu0 0.0
        %717 = vmatpush1.msra.mxu0 %v685
        %718 = vmatprep.subr.mxu0 0.0
        %719 = vmatpush1.msra.mxu0 0.0
        %720 = vmatprep.subr.mxu0 0.0
        %721 = vmatpush1.msra.mxu0 0.0
        %722 = vmatprep.subr.mxu0 0.0
        %723 = vmatpush1.msra.mxu0 0.0
        %724 = vmatprep.subr.mxu0 0.0
        %725 = vmatpush1.msra.mxu0 0.0
        %726 = vmatprep.subr.mxu0 0.0
        %727 = vmatpush1.msra.mxu0 0.0
        %728 = vmatprep.subr.mxu0 0.0
        %729 = vmatpush1.msra.mxu0 0.0
        %730 = vmatprep.subr.mxu0 0.0
        %731 = vmatpush1.msra.mxu0 0.0
        %732 = vmatprep.subr.mxu0 0.0
        %733 = vmatpush1.msra.mxu0 0.0
        %734 = vmatprep.subr.mxu0 0.0
        %735 = vmatpush1.msra.mxu0 0.0
        %736 = vmatprep.subr.mxu0 0.0
        %737 = vmatpush1.msra.mxu0 0.0
        %738 = vmatprep.subr.mxu0 0.0
        %739 = vmatpush1.msra.mxu0 0.0
        %740 = vmatprep.subr.mxu0 0.0
        %741 = vmatpush1.msra.mxu0 0.0
        %742 = vmatprep.subr.mxu0 0.0
        %743 = vmatpush1.msra.mxu0 0.0
        %744 = vmatprep.subr.mxu0 0.0
        %745 = vmatpush1.msra.mxu0 0.0
        %746 = vmatprep.subr.mxu0 0.0
        %747 = vmatpush1.msra.mxu0 0.0
        %748 = vmatprep.subr.mxu0 0.0
        %749 = vmatpush1.msra.mxu0 0.0
        %750 = vmatprep.mubr.f32.mxu0 0.0
        %751 = vmatmul.mubr.f32.gmra.mrb[0].mxu0 %v667
        %v752 = vpop.f32.mrb[0].mxu0
        %v753 = vadd.f32 0.0, %v752
        %v754 = vpop.f32.mrb[0].mxu0
        %755 = vmatprep.mubr.f32.mxu0 0.0
        %756 = vmatmul.mubr.f32.gmra.mrb[0].mxu0 %v668
        %v757 = vpop.f32.mrb[0].mxu0
        %v758 = vadd.f32 0.0, %v757
        %v759 = vpop.f32.mrb[0].mxu0
        %760 = vdwg.mxu0
        %v761 = vadd.f32 %v665, %v753
        %v762 = vadd.f32 %v666, %v758
        %v763 = vld [vmem:[#allocation2 + $0x5] sm:$0xff]
        %v764 = vld [vmem:[#allocation2 + $0xd] sm:$0xff]
        %s765 = scalar_lea.vmem [#allocation3], 640
        %v766 = vld [vmem:[%s765] sm:$0xff]
        %v767 = vld [vmem:[%s765 + $0x8] sm:$0xff]
        %v768 = vld [vmem:[%s765 + $0x10] sm:$0xff]
        %v769 = vld [vmem:[%s765 + $0x18] sm:$0xff]
        %v770 = vld [vmem:[%s765 + $0x20] sm:$0xff]
        %v771 = vld [vmem:[%s765 + $0x28] sm:$0xff]
        %v772 = vld [vmem:[%s765 + $0x30] sm:$0xff]
        %v773 = vld [vmem:[%s765 + $0x38] sm:$0xff]
        %v774 = vld [vmem:[%s765 + $0x40] sm:$0xff]
        %v775 = vld [vmem:[%s765 + $0x48] sm:$0xff]
        %v776 = vld [vmem:[%s765 + $0x50] sm:$0xff]
        %v777 = vld [vmem:[%s765 + $0x58] sm:$0xff]
        %v778 = vld [vmem:[%s765 + $0x60] sm:$0xff]
        %v779 = vld [vmem:[%s765 + $0x68] sm:$0xff]
        %v780 = vld [vmem:[%s765 + $0x70] sm:$0xff]
        %v781 = vld [vmem:[%s765 + $0x78] sm:$0xff]
        %782 = vmatprep.subr.mxu0 0.0
        %783 = vmatpush1.msra.mxu0 %v766
        %784 = vmatprep.subr.mxu0 0.0
        %785 = vmatpush1.msra.mxu0 %v767
        %786 = vmatprep.subr.mxu0 0.0
        %787 = vmatpush1.msra.mxu0 %v768
        %788 = vmatprep.subr.mxu0 0.0
        %789 = vmatpush1.msra.mxu0 %v769
        %790 = vmatprep.subr.mxu0 0.0
        %791 = vmatpush1.msra.mxu0 %v770
        %792 = vmatprep.subr.mxu0 0.0
        %793 = vmatpush1.msra.mxu0 %v771
        %794 = vmatprep.subr.mxu0 0.0
        %795 = vmatpush1.msra.mxu0 %v772
        %796 = vmatprep.subr.mxu0 0.0
        %797 = vmatpush1.msra.mxu0 %v773
        %798 = vmatprep.subr.mxu0 0.0
        %799 = vmatpush1.msra.mxu0 %v774
        %800 = vmatprep.subr.mxu0 0.0
        %801 = vmatpush1.msra.mxu0 %v775
        %802 = vmatprep.subr.mxu0 0.0
        %803 = vmatpush1.msra.mxu0 %v776
        %804 = vmatprep.subr.mxu0 0.0
        %805 = vmatpush1.msra.mxu0 %v777
        %806 = vmatprep.subr.mxu0 0.0
        %807 = vmatpush1.msra.mxu0 %v778
        %808 = vmatprep.subr.mxu0 0.0
        %809 = vmatpush1.msra.mxu0 %v779
        %810 = vmatprep.subr.mxu0 0.0
        %811 = vmatpush1.msra.mxu0 %v780
        %812 = vmatprep.subr.mxu0 0.0
        %813 = vmatpush1.msra.mxu0 %v781
        %814 = vmatprep.subr.mxu0 0.0
        %815 = vmatpush1.msra.mxu0 0.0
        %816 = vmatprep.subr.mxu0 0.0
        %817 = vmatpush1.msra.mxu0 0.0
        %818 = vmatprep.subr.mxu0 0.0
        %819 = vmatpush1.msra.mxu0 0.0
        %820 = vmatprep.subr.mxu0 0.0
        %821 = vmatpush1.msra.mxu0 0.0
        %822 = vmatprep.subr.mxu0 0.0
        %823 = vmatpush1.msra.mxu0 0.0
        %824 = vmatprep.subr.mxu0 0.0
        %825 = vmatpush1.msra.mxu0 0.0
        %826 = vmatprep.subr.mxu0 0.0
        %827 = vmatpush1.msra.mxu0 0.0
        %828 = vmatprep.subr.mxu0 0.0
        %829 = vmatpush1.msra.mxu0 0.0
        %830 = vmatprep.subr.mxu0 0.0
        %831 = vmatpush1.msra.mxu0 0.0
        %832 = vmatprep.subr.mxu0 0.0
        %833 = vmatpush1.msra.mxu0 0.0
        %834 = vmatprep.subr.mxu0 0.0
        %835 = vmatpush1.msra.mxu0 0.0
        %836 = vmatprep.subr.mxu0 0.0
        %837 = vmatpush1.msra.mxu0 0.0
        %838 = vmatprep.subr.mxu0 0.0
        %839 = vmatpush1.msra.mxu0 0.0
        %840 = vmatprep.subr.mxu0 0.0
        %841 = vmatpush1.msra.mxu0 0.0
        %842 = vmatprep.subr.mxu0 0.0
        %843 = vmatpush1.msra.mxu0 0.0
        %844 = vmatprep.subr.mxu0 0.0
        %845 = vmatpush1.msra.mxu0 0.0
        %846 = vmatprep.mubr.f32.mxu0 0.0
        %847 = vmatmul.mubr.f32.gmra.mrb[0].mxu0 %v763
        %v848 = vpop.f32.mrb[0].mxu0
        %v849 = vadd.f32 0.0, %v848
        %v850 = vpop.f32.mrb[0].mxu0
        %851 = vmatprep.mubr.f32.mxu0 0.0
        %852 = vmatmul.mubr.f32.gmra.mrb[0].mxu0 %v764
        %v853 = vpop.f32.mrb[0].mxu0
        %v854 = vadd.f32 0.0, %v853
        %v855 = vpop.f32.mrb[0].mxu0
        %856 = vdwg.mxu0
        %v857 = vadd.f32 %v761, %v849
        %v858 = vadd.f32 %v762, %v854
        %v859 = vld [vmem:[#allocation2 + $0x6] sm:$0xff]
        %v860 = vld [vmem:[#allocation2 + $0xe] sm:$0xff]
        %s861 = scalar_lea.vmem [#allocation3], 768
        %v862 = vld [vmem:[%s861] sm:$0xff]
        %v863 = vld [vmem:[%s861 + $0x8] sm:$0xff]
        %v864 = vld [vmem:[%s861 + $0x10] sm:$0xff]
        %v865 = vld [vmem:[%s861 + $0x18] sm:$0xff]
        %v866 = vld [vmem:[%s861 + $0x20] sm:$0xff]
        %v867 = vld [vmem:[%s861 + $0x28] sm:$0xff]
        %v868 = vld [vmem:[%s861 + $0x30] sm:$0xff]
        %v869 = vld [vmem:[%s861 + $0x38] sm:$0xff]
        %v870 = vld [vmem:[%s861 + $0x40] sm:$0xff]
        %v871 = vld [vmem:[%s861 + $0x48] sm:$0xff]
        %v872 = vld [vmem:[%s861 + $0x50] sm:$0xff]
        %v873 = vld [vmem:[%s861 + $0x58] sm:$0xff]
        %v874 = vld [vmem:[%s861 + $0x60] sm:$0xff]
        %v875 = vld [vmem:[%s861 + $0x68] sm:$0xff]
        %v876 = vld [vmem:[%s861 + $0x70] sm:$0xff]
        %v877 = vld [vmem:[%s861 + $0x78] sm:$0xff]
        %878 = vmatprep.subr.mxu0 0.0
        %879 = vmatpush1.msra.mxu0 %v862
        %880 = vmatprep.subr.mxu0 0.0
        %881 = vmatpush1.msra.mxu0 %v863
        %882 = vmatprep.subr.mxu0 0.0
        %883 = vmatpush1.msra.mxu0 %v864
        %884 = vmatprep.subr.mxu0 0.0
        %885 = vmatpush1.msra.mxu0 %v865
        %886 = vmatprep.subr.mxu0 0.0
        %887 = vmatpush1.msra.mxu0 %v866
        %888 = vmatprep.subr.mxu0 0.0
        %889 = vmatpush1.msra.mxu0 %v867
        %890 = vmatprep.subr.mxu0 0.0
        %891 = vmatpush1.msra.mxu0 %v868
        %892 = vmatprep.subr.mxu0 0.0
        %893 = vmatpush1.msra.mxu0 %v869
        %894 = vmatprep.subr.mxu0 0.0
        %895 = vmatpush1.msra.mxu0 %v870
        %896 = vmatprep.subr.mxu0 0.0
        %897 = vmatpush1.msra.mxu0 %v871
        %898 = vmatprep.subr.mxu0 0.0
        %899 = vmatpush1.msra.mxu0 %v872
        %900 = vmatprep.subr.mxu0 0.0
        %901 = vmatpush1.msra.mxu0 %v873
        %902 = vmatprep.subr.mxu0 0.0
        %903 = vmatpush1.msra.mxu0 %v874
        %904 = vmatprep.subr.mxu0 0.0
        %905 = vmatpush1.msra.mxu0 %v875
        %906 = vmatprep.subr.mxu0 0.0
        %907 = vmatpush1.msra.mxu0 %v876
        %908 = vmatprep.subr.mxu0 0.0
        %909 = vmatpush1.msra.mxu0 %v877
        %910 = vmatprep.subr.mxu0 0.0
        %911 = vmatpush1.msra.mxu0 0.0
        %912 = vmatprep.subr.mxu0 0.0
        %913 = vmatpush1.msra.mxu0 0.0
        %914 = vmatprep.subr.mxu0 0.0
        %915 = vmatpush1.msra.mxu0 0.0
        %916 = vmatprep.subr.mxu0 0.0
        %917 = vmatpush1.msra.mxu0 0.0
        %918 = vmatprep.subr.mxu0 0.0
        %919 = vmatpush1.msra.mxu0 0.0
        %920 = vmatprep.subr.mxu0 0.0
        %921 = vmatpush1.msra.mxu0 0.0
        %922 = vmatprep.subr.mxu0 0.0
        %923 = vmatpush1.msra.mxu0 0.0
        %924 = vmatprep.subr.mxu0 0.0
        %925 = vmatpush1.msra.mxu0 0.0
        %926 = vmatprep.subr.mxu0 0.0
        %927 = vmatpush1.msra.mxu0 0.0
        %928 = vmatprep.subr.mxu0 0.0
        %929 = vmatpush1.msra.mxu0 0.0
        %930 = vmatprep.subr.mxu0 0.0
        %931 = vmatpush1.msra.mxu0 0.0
        %932 = vmatprep.subr.mxu0 0.0
        %933 = vmatpush1.msra.mxu0 0.0
        %934 = vmatprep.subr.mxu0 0.0
        %935 = vmatpush1.msra.mxu0 0.0
        %936 = vmatprep.subr.mxu0 0.0
        %937 = vmatpush1.msra.mxu0 0.0
        %938 = vmatprep.subr.mxu0 0.0
        %939 = vmatpush1.msra.mxu0 0.0
        %940 = vmatprep.subr.mxu0 0.0
        %941 = vmatpush1.msra.mxu0 0.0
        %942 = vmatprep.mubr.f32.mxu0 0.0
        %943 = vmatmul.mubr.f32.gmra.mrb[0].mxu0 %v859
        %v944 = vpop.f32.mrb[0].mxu0
        %v945 = vadd.f32 0.0, %v944
        %v946 = vpop.f32.mrb[0].mxu0
        %947 = vmatprep.mubr.f32.mxu0 0.0
        %948 = vmatmul.mubr.f32.gmra.mrb[0].mxu0 %v860
        %v949 = vpop.f32.mrb[0].mxu0
        %v950 = vadd.f32 0.0, %v949
        %v951 = vpop.f32.mrb[0].mxu0
        %952 = vdwg.mxu0
        %v953 = vadd.f32 %v857, %v945
        %v954 = vadd.f32 %v858, %v950
        %v955 = vld [vmem:[%s260] sm:$0x1]
        %v957 = vlaneseq
        %v958 = vshrl.u32 %v957, 7
        %v959 = vsub.s32 0, %v958
        %v960 = vrot.slane %v955, %v959
        %v962 = vmul.f32 %v953, %v960
        %v963 = vmul.f32 %v954, %v960
        %v964 = vld [vmem:[%s263] sm:$0x1]
        %v966 = vlaneseq
        %v967 = vshrl.u32 %v966, 7
        %v968 = vsub.s32 0, %v967
        %v969 = vrot.slane %v964, %v968
        %v971 = vadd.f32 %v962, %v969
        %v972 = vadd.f32 %v963, %v969
        %vm973 = vcmp.gt.f32.partialorder %v971, 0.0
        %vm974 = vcmp.gt.f32.partialorder %v972, 0.0
        %v975 = vmin.f32 %v971, 0.0
        %v976 = vmin.f32 %v972, 0.0
        %v977 = vmul.f32 %v975, 1.442695
        %v978 = vpow.pop %v977
        %v979 = vmul.f32 %v976, 1.442695
        %v980 = vpow.pop %v979
        %v981 = vsub.f32 %v978, 1.0
        %v982 = vsub.f32 %v980, 1.0
        %v983 = vsel %vm973, %v971, %v981
        %v984 = vsel %vm974, %v972, %v982
        %s985 = sld [smem:[#allocation7]]
        %v986 = vstv %s985
        %v987 = vmul.f32 %v983, %v986
        %v988 = vmul.f32 %v984, %v986
        %s989 = sld [smem:[#allocation7 + $0x1]]
        %v990 = vstv %s989
        %v991 = vadd.f32 %v987, %v990
        %v992 = vadd.f32 %v988, %v990
        %993 = vst [vmem:[%s257] sm:$0xff] %v991
        %994 = vst [vmem:[%s257 + $0x8] sm:$0xff] %v992
        %s995 = sand.u32 %s151, 1
        %s996 = scalar_lea.sflag [#allocation5], %s995
        %s997 = sand.u32 %s151, 1
        %s998 = smul.addr %s997, 16
        %s999 = scalar_lea.vmem [#allocation8], %s998
        // Predicated region
        $region54: #{tpu_custom_call.1} parent=35 // pred_check
          %p1000 = pneg %p161
        $region55: #{tpu_custom_call.1} parent=35 // pred_check_branch
          %1002 = sbr.rel (%p1000) target = $region57
        $region56: #{tpu_custom_call.1} parent=35 // pred_region
          %s1003 = smul.u32 2, %s27
          %s1005 = ssub.s32 256, 256
          %1006 = vsyncadd %s996, %s1005
          %s1007 = sadd.s32 %s28, %s1003
          %s1008 = smul.addr %s26, 2
          %s1009 = sadd.s32 %s1007, %s1008
          %s1010 = smul.addr %s1009, 128
          %s1011 = scalar_lea.hbm %s5, %s1010
          %s1012 = sshll.u32 %s999, 4
          %s1013 = int_to_ptr.vmem [resolvable:$true] %s1012
          %1018 = dma.vmem_to_hbm [thread:$0]  %s1013, 256, %s1011, %s996, 128, 128, 8
        $region57: #{tpu_custom_call.1} parent=35 // pred_fallthru
          _
      $region36: #{tpu_custom_call.1} parent=5 // pred_fallthru
        _
      %p1019 = scmp.le.s32.totalorder 2, %s16
      // Predicated region
      $region58: #{tpu_custom_call.1} parent=5 // pred_check
        %p1020 = pneg %p1019
      $region59: #{tpu_custom_call.1} parent=5 // pred_check_branch
        %1022 = sbr.rel (%p1020) target = $region61
      $region60: #{tpu_custom_call.1} parent=5 // pred_region
        %s1023 = ssub.s32 %s16, 2
        // Predicated region
        $region62: #{tpu_custom_call.1} parent=60 // pred_check
          %p1024 = pneg %p167
        $region63: #{tpu_custom_call.1} parent=60 // pred_check_branch
          %1026 = sbr.rel (%p1024) target = $region65
        $region64: #{tpu_custom_call.1} parent=60 // pred_region
          %s1027 = sand.u32 %s152, 1
          %s1028 = scalar_lea.sflag [#allocation5], %s1027
          %s1029 = sand.u32 %s152, 1
          %s1030 = smul.addr %s1029, 16
          %s1031 = scalar_lea.vmem [#allocation8], %s1030
          %1032 = dma.done %s1028, 256
        $region65: #{tpu_custom_call.1} parent=60 // pred_fallthru
          _
      $region61: #{tpu_custom_call.1} parent=5 // pred_fallthru
        _
    $region6: #{tpu_custom_call.1} parent=1 // loop_footer
      %s20 = sadd.s32 1, %s16
    $region7: #{tpu_custom_call.1} parent=1 // loop_footer_branch
      %15 = sbr.rel target = $region3
    $region8: #{tpu_custom_call.1} parent=1 // loop_exit
      _
    %1033 = vsyncpa [#allocation4], 1
    %s1034 = scalar_lea.sflag [#allocation4], 1
    %1035 = vsyncpa %s1034, 1
    %1036 = vsyncpa [#allocation5], 1
    %s1037 = scalar_lea.sflag [#allocation5], 1
    %1038 = vsyncpa %s1037, 1
    %1039 = vsyncpa [#allocation6], 1
    %s1040 = scalar_lea.sflag [#allocation6], 1
    %1041 = vsyncpa %s1040, 1

</llo_original>
